<compile_context>
chip_gen: v5e
topology: v5e:2x2
jax: 0.10.0
libtpu: 0.0.40
codegen_flags: <defaults>
</compile_context>

<pallas_src>
import math

import jax
import jax.numpy as jnp
from jax import lax
from jax.experimental import pallas as pl
from jax.experimental.pallas import tpu as pltpu

# Plain Python floats (NOT jnp scalars) so kernels never capture traced consts.
_NEG = -3.0e38          # masked-max sentinel (representable in bf16)
_EMPTY = -1.0e38        # "voxel never touched" threshold (checked in f32)
_CV = 8                 # voxel rows per select/max sub-chunk inside segmax


def _round_up(x, m):
    return ((x + m - 1) // m) * m


# ----------------------------------------------------------------------------
# Pallas kernels
# ----------------------------------------------------------------------------

def entry_kernel(feat_ref, wp_ref, bp_ref, w0_ref, b0_ref, w1_ref, b1_ref,
                 ws_ref, o_ref):
    """net = ResnetBlock0(fc_pos(features)); all intermediates stay in VMEM."""
    f = feat_ref[...].astype(jnp.bfloat16)
    h = jnp.dot(f, wp_ref[...], preferred_element_type=jnp.float32) + bp_ref[...]
    a = jnp.maximum(h, 0.0).astype(jnp.bfloat16)
    n1 = jnp.dot(a, w0_ref[...], preferred_element_type=jnp.float32) + b0_ref[...]
    dx = jnp.dot(jnp.maximum(n1, 0.0).astype(jnp.bfloat16), w1_ref[...],
                 preferred_element_type=jnp.float32) + b1_ref[...]
    xs = jnp.dot(h.astype(jnp.bfloat16), ws_ref[...],
                 preferred_element_type=jnp.float32)
    # TODO(synk): present a lane-dense [tm/4, 128] output slab (in-kernel
    # reshape) to turn the 32-lane masked stores into full-width vst.
    o_ref[...] = (xs + dx).astype(o_ref.dtype)


def make_mid_block_kernel(fuse_fc_c):
    """ResnetBlockFC on the (implicit) concat [net, pooled]; optionally fuses
    the trailing fc_c linear so the last block writes `feats` directly.
    Note: the reference applies fc_c to the raw block output (no activation),
    which is exactly what the fused path does."""
    def kernel(net_ref, pooled_ref, w0a_ref, w0b_ref, b0_ref, w1_ref, b1_ref,
               wsa_ref, wsb_ref, *rest):
        if fuse_fc_c:
            wc_ref, bc_ref, o_ref = rest
        else:
            (o_ref,) = rest
        net = net_ref[...]                       # bf16 [tm, F]
        pooled = pooled_ref[...]                 # bf16 [tm, F]
        an = jnp.maximum(net, 0.0).astype(jnp.bfloat16)
        ap = jnp.maximum(pooled, 0.0).astype(jnp.bfloat16)
        # relu(cat(net, pooled)) @ W0 == relu(net) @ W0[:F] + relu(pooled) @ W0[F:]
        h = (jnp.dot(an, w0a_ref[...], preferred_element_type=jnp.float32)
             + jnp.dot(ap, w0b_ref[...], preferred_element_type=jnp.float32)
             + b0_ref[...])
        dx = jnp.dot(jnp.maximum(h, 0.0).astype(jnp.bfloat16), w1_ref[...],
                     preferred_element_type=jnp.float32) + b1_ref[...]
        xs = (jnp.dot(net, wsa_ref[...], preferred_element_type=jnp.float32)
              + jnp.dot(pooled, wsb_ref[...], preferred_element_type=jnp.float32))
        out = xs + dx
        if fuse_fc_c:
            out = jnp.dot(out.astype(jnp.bfloat16), wc_ref[...],
                          preferred_element_type=jnp.float32) + bc_ref[...]
        o_ref[...] = out.astype(o_ref.dtype)
    return kernel


def segmax_kernel(p2v_ref, x_ref, seg_ref):
    """Accumulating scatter-max over points.

    grid = (V_pad // tv, N_pad // tn); the (tv, F) output block is resident
    across the point axis (index_map constant in j, axis marked 'arbitrary').

    Perf structure (per review):
      * x transposed once per tile -> [F, tn]: point axis (tn) on lanes, so the
        select and the max-reduce are lane-dense and the reduce uses the XLU.
      * bf16 select/max (exact: max is order-preserving) over [_CV, F, tn]
        sub-chunks of voxel rows -> bounded ~16-vreg working set, no rank-3
        f32 spill.
      * Only the running (tv, F) accumulator is f32.
    Padded points carry p2v == -1 (never match); empty voxels finalize to 0
    (torch_scatter zero-fills untouched outputs).
    """
    i = pl.program_id(0)                      # voxel tile  (parallel)
    j = pl.program_id(1)                      # point tile  (reduction)
    tv, _ = seg_ref.shape
    tn = x_ref.shape[0]

    @pl.when(j == 0)
    def _init():
        seg_ref[...] = jnp.full_like(seg_ref, _NEG)

    p2v = p2v_ref[...]                                   # [1, tn]  int32
    xt = x_ref[...].astype(jnp.bfloat16).T               # [F, tn]  bf16 (XLU)

    for vc in range(tv // _CV):
        rows = slice(vc * _CV, (vc + 1) * _CV)
        ids = (lax.broadcasted_iota(jnp.int32, (_CV, tn), 0)
               + (i * tv + vc * _CV))                    # [_CV, tn]
        m = ids == p2v                                   # [_CV, tn]
        vals = jnp.where(m[:, None, :], xt[None, :, :], _NEG)   # [_CV,F,tn] bf16
        part = jnp.max(vals, axis=-1).astype(jnp.float32)        # [_CV, F]
        seg_ref[rows, :] = jnp.maximum(seg_ref[rows, :], part)

    @pl.when(j == pl.num_programs(1) - 1)
    def _finalize():
        s = seg_ref[...]
        seg_ref[...] = jnp.where(s <= _EMPTY, 0.0, s)


def linear_kernel(x_ref, w_ref, b_ref, o_ref):
    """Plain tiled linear (only used for depth == 1, where no mid block exists)."""
    o_ref[...] = (jnp.dot(x_ref[...], w_ref[...],
                          preferred_element_type=jnp.float32)
                  + b_ref[...]).astype(o_ref.dtype)


# ----------------------------------------------------------------------------
# pallas_call wrappers
# ----------------------------------------------------------------------------

def _rep_spec(shape):
    """Full-array block, same block every grid step (weights stay resident)."""
    zeros = (0,) * len(shape)
    return pl.BlockSpec(shape, lambda *_: zeros)


def _row_spec(tm, c):
    return pl.BlockSpec((tm, c), lambda i: (i, 0))


_PARALLEL = pltpu.CompilerParams(dimension_semantics=("parallel",))


def pallas_entry(features, params, tm):
    n, c = features.shape
    blk0 = params["blocks"][0]
    fo = blk0["w1"].shape[1]
    args = [params["fc_pos_w"], params["fc_pos_b"], blk0["w0"], blk0["b0"],
            blk0["w1"], blk0["b1"], blk0["ws"]]
    return pl.pallas_call(
        entry_kernel,
        out_shape=jax.ShapeDtypeStruct((n, fo), jnp.bfloat16),
        grid=(n // tm,),
        in_specs=[_row_spec(tm, c)] + [_rep_spec(a.shape) for a in args],
        out_specs=_row_spec(tm, fo),
        compiler_params=_PARALLEL,
    )(features, *args)


def pallas_mid_block(net, pooled, blk, tm, fc_c=None):
    n, f = net.shape
    fuse = fc_c is not None
    w0a, w0b = blk["w0"][:f], blk["w0"][f:]      # split of the concat matmul
    wsa, wsb = blk["ws"][:f], blk["ws"][f:]
    args = [w0a, w0b, blk["b0"], blk["w1"], blk["b1"], wsa, wsb]
    if fuse:
        args += [fc_c[0], fc_c[1]]
    return pl.pallas_call(
        make_mid_block_kernel(fuse),
        out_shape=jax.ShapeDtypeStruct((n, f), jnp.bfloat16),
        grid=(n // tm,),
        in_specs=[_row_spec(tm, f)] * 2 + [_rep_spec(a.shape) for a in args],
        out_specs=_row_spec(tm, f),
        compiler_params=_PARALLEL,
    )(net, pooled, *args)


def pallas_segmax(p2v_row, x, num_voxels, tn=128, voxel_tile=128):
    """Scatter-max of x ([N_pad, F]) into num_voxels rows.  Pads the voxel axis
    internally (no divisibility requirement on num_voxels) and keeps >= 2 voxel
    tiles when possible so both v7x TensorCores get work."""
    n, f = x.shape
    assert n % tn == 0
    tv = _round_up(min(voxel_tile, _round_up(num_voxels, _CV)), _CV)
    while tv > _CV and _round_up(num_voxels, tv) < 2 * tv:
        tv = _round_up(tv // 2, _CV)
    v_pad = _round_up(num_voxels, tv)
    out = pl.pallas_call(
        segmax_kernel,
        out_shape=jax.ShapeDtypeStruct((v_pad, f), jnp.float32),
        grid=(v_pad // tv, n // tn),
        in_specs=[pl.BlockSpec((1, tn), lambda i, j: (0, j)),    # p2v row
                  pl.BlockSpec((tn, f), lambda i, j: (j, 0))],   # features
        out_specs=pl.BlockSpec((tv, f), lambda i, j: (i, 0)),    # resident acc
        compiler_params=pltpu.CompilerParams(
            dimension_semantics=("parallel", "arbitrary")),
    )(p2v_row, x)
    return out if v_pad == num_voxels else out[:num_voxels]


def pallas_linear(x, w, b, tm):
    n = x.shape[0]
    dout = w.shape[1]
    return pl.pallas_call(
        linear_kernel,
        out_shape=jax.ShapeDtypeStruct((n, dout), jnp.bfloat16),
        grid=(n // tm,),
        in_specs=[_row_spec(tm, x.shape[1]), _rep_spec(w.shape), _rep_spec(b.shape)],
        out_specs=_row_spec(tm, dout),
        compiler_params=_PARALLEL,
    )(x, w, b)


# ----------------------------------------------------------------------------
# Parameter init (matches nn.Linear shapes; fc_1.weight zeroed).  Weights are
# stored bf16 (MXU operand), biases f32 (accumulator add).
# ----------------------------------------------------------------------------

def _init_linear(key, din, dout, zero_weight=False, bias=True):
    kw, kb = jax.random.split(key)
    bound = 1.0 / math.sqrt(din)
    if zero_weight:
        w = jnp.zeros((din, dout), jnp.float32)
    else:
        w = jax.random.uniform(kw, (din, dout), jnp.float32, -bound, bound)
    w = w.astype(jnp.bfloat16)
    b = (jax.random.uniform(kb, (1, dout), jnp.float32, -bound, bound)
         if bias else None)
    return w, b


def init_params(key, num_input_features, num_filters, depth):
    keys = jax.random.split(key, 2 + depth)
    params = {}
    params["fc_pos_w"], params["fc_pos_b"] = _init_linear(
        keys[0], num_input_features, 2 * num_filters)
    params["fc_c_w"], params["fc_c_b"] = _init_linear(
        keys[1], num_filters, num_filters)
    blocks = []
    for i in range(depth):
        k0, k1, ks = jax.random.split(keys[2 + i], 3)
        size_in, size_out = 2 * num_filters, num_filters
        size_h = min(size_in, size_out)
        w0, b0 = _init_linear(k0, size_in, size_h)
        w1, b1 = _init_linear(k1, size_h, size_out, zero_weight=True)  # zeros_
        ws, _ = _init_linear(ks, size_in, size_out, bias=False)
        blocks.append({"w0": w0, "b0": b0, "w1": w1, "b1": b1, "ws": ws})
    params["blocks"] = blocks
    return params


# ----------------------------------------------------------------------------
# Forward pass
# ----------------------------------------------------------------------------

def pillar_feature_net_forward(params, cfg, raw_points, point_to_voxel_map,
                               coordinates, pillar_mean, time_indice,
                               num_voxels, point_tile=1024, voxel_tile=128):
    vx, vy = cfg["voxel_size"][0], cfg["voxel_size"][1]
    x_offset = vx / 2.0 + cfg["pc_range"][0]
    y_offset = vy / 2.0 + cfg["pc_range"][1]
    scale = abs(cfg["pc_range"][0])
    n_frames = cfg["n_sweeps"]

    p2v = point_to_voxel_map.astype(jnp.int32)

    # --- feature assembly (cheap [N, 9] glue; gathers stay in XLA) ---
    dist_to_pts_mean = raw_points - pillar_mean[p2v]
    mapped = coordinates[p2v].astype(jnp.float32)
    fc_x = raw_points[:, 0] - (mapped[:, 3] * vx + x_offset)
    fc_y = raw_points[:, 1] - (mapped[:, 2] * vy + y_offset)
    f_center = jnp.stack([fc_x, fc_y], axis=1)
    features = jnp.concatenate(
        [raw_points, dist_to_pts_mean, f_center,
         time_indice[:, 1:2].astype(jnp.float32)], axis=-1)
    features = jnp.concatenate(
        [features[:, :-1] / scale, features[:, -1:] / n_frames], axis=-1)

    # --- point tile: large (amortize per-grid-step overhead) but keep >= 2
    #     tiles when possible so both v7x TensorCores get work ---
    n = features.shape[0]
    tm = _round_up(min(point_tile, _round_up(n, 128)), 128)
    while tm > 128 and _round_up(n, tm) < 2 * tm:
        tm = _round_up(tm // 2, 128)
    n_pad = _round_up(n, tm)
    pad = n_pad - n
    if pad:
        features = jnp.concatenate(
            [features, jnp.zeros((pad, features.shape[1]), features.dtype)], 0)
        p2v = jnp.concatenate([p2v, jnp.full((pad,), -1, jnp.int32)], 0)
    p2v_row = p2v.reshape(1, -1)
    p2v_gather = jnp.clip(p2v, 0, num_voxels - 1)
    seg_tn = 128    # segmax point tile: keeps the bf16 chunk temps ~16 vregs

    # --- hot path: fused MLP kernels + accumulating scatter-max kernels ---
    net = pallas_entry(features, params, tm)              # [n_pad, F] bf16
    blocks = params["blocks"]
    depth = len(blocks)
    if depth == 1:
        feats = pallas_linear(net, params["fc_c_w"], params["fc_c_b"], tm)
    else:
        for bi in range(1, depth):
            seg = pallas_segmax(p2v_row, net, num_voxels, seg_tn, voxel_tile)
            # TODO(synk): fuse this gather into the mid-block kernel (seg kept
            # resident in VMEM + per-tile p2v indices) when V*F*4B fits the
            # VMEM budget; falls back to this XLA gather otherwise.
            pooled = jnp.take(seg, p2v_gather, axis=0).astype(jnp.bfloat16)
            fuse = bi == depth - 1
            net = pallas_mid_block(
                net, pooled, blocks[bi], tm,
                fc_c=(params["fc_c_w"], params["fc_c_b"]) if fuse else None)
        feats = net                                        # fc_c already fused
    return pallas_segmax(p2v_row, feats, num_voxels, seg_tn, voxel_tile)


# ----------------------------------------------------------------------------
# Demo
# ----------------------------------------------------------------------------

if __name__ == "__main__":
    cfg = {
        "num_input_features": 9,    # 3 (xyz) + 3 (dist) + 2 (center) + 1 (time)
        "num_filters": 32,
        "voxel_size": [0.2, 0.2, 8.0],
        "pc_range": [-51.2, -51.2, -5.0, 51.2, 51.2, 3.0],
        "depth": 3,
        "n_sweeps": 10,
    }

    N_POINTS = 1024
    N_VOXELS = 100   # deliberately not a multiple of 8/128: exercises voxel padding

    key = jax.random.PRNGKey(0)
    k_param, k_pts, k_mean, k_coord, k_time, k_map = jax.random.split(key, 6)

    params = init_params(k_param, cfg["num_input_features"],
                         cfg["num_filters"], cfg["depth"])

    raw_points = jax.random.uniform(
        k_pts, (N_POINTS, 3), jnp.float32, -51.2, 51.2)
    point_to_voxel_map = jax.random.randint(
        k_map, (N_POINTS,), 0, N_VOXELS, dtype=jnp.int32)
    pillar_mean = jax.random.uniform(
        k_mean, (N_VOXELS, 3), jnp.float32, -51.2, 51.2)
    coordinates = jax.random.randint(
        k_coord, (N_VOXELS, 4), 0, 512, dtype=jnp.int32)
    time_indice = jnp.stack(
        [jnp.arange(N_POINTS, dtype=jnp.int32),
         jax.random.randint(k_time, (N_POINTS,), 0, cfg["n_sweeps"],
                            dtype=jnp.int32)], axis=1)

    out = pillar_feature_net_forward(
        params, cfg, raw_points, point_to_voxel_map, coordinates,
        pillar_mean, time_indice, N_VOXELS,
        point_tile=1024, voxel_tile=128)
    out = jax.block_until_ready(out)

    assert out.shape == (N_VOXELS, cfg["num_filters"])
    assert bool(jnp.all(jnp.isfinite(out)))
    print("KERNEL_OK")
</pallas_src>

<mosaic_0001>
module attributes {stable_mosaic.version = 11 : i64} {
  func.func @entry_kernel(%arg0: i32, %arg1: memref<512x9xf32, #tpu.memory_space<vmem>>, %arg2: memref<9x64xbf16, #tpu.memory_space<vmem>>, %arg3: memref<1x64xf32, #tpu.memory_space<vmem>>, %arg4: memref<64x32xbf16, #tpu.memory_space<vmem>>, %arg5: memref<1x32xf32, #tpu.memory_space<vmem>>, %arg6: memref<32x32xbf16, #tpu.memory_space<vmem>>, %arg7: memref<1x32xf32, #tpu.memory_space<vmem>>, %arg8: memref<64x32xbf16, #tpu.memory_space<vmem>>, %arg9: memref<512x32xbf16, #tpu.memory_space<vmem>>) attributes {dimension_semantics = [#tpu.dimension_semantics<parallel>], iteration_bounds = array<i64: 2>, scalar_prefetch = 0 : i64, scratch_operands = 0 : i64, tpu.core_type = #tpu.core_type<tc>, window_params = [{transform_indices = @transform_0, window_bounds = array<i64: 512, 9>}, {pipeline_mode = #tpu.pipeline_mode<synchronous>, transform_indices = @transform_1, window_bounds = array<i64: 9, 64>}, {pipeline_mode = #tpu.pipeline_mode<synchronous>, transform_indices = @transform_2, window_bounds = array<i64: 1, 64>}, {pipeline_mode = #tpu.pipeline_mode<synchronous>, transform_indices = @transform_3, window_bounds = array<i64: 64, 32>}, {pipeline_mode = #tpu.pipeline_mode<synchronous>, transform_indices = @transform_4, window_bounds = array<i64: 1, 32>}, {pipeline_mode = #tpu.pipeline_mode<synchronous>, transform_indices = @transform_5, window_bounds = array<i64: 32, 32>}, {pipeline_mode = #tpu.pipeline_mode<synchronous>, transform_indices = @transform_6, window_bounds = array<i64: 1, 32>}, {pipeline_mode = #tpu.pipeline_mode<synchronous>, transform_indices = @transform_7, window_bounds = array<i64: 64, 32>}, {transform_indices = @transform_8, window_bounds = array<i64: 512, 32>}]} {
    %c0 = arith.constant 0 : index
    %c0_0 = arith.constant 0 : index
    %0 = vector.load %arg1[%c0, %c0_0] : memref<512x9xf32, #tpu.memory_space<vmem>>, vector<512x9xf32>
    %1 = arith.truncf %0 : vector<512x9xf32> to vector<512x9xbf16>
    %c0_1 = arith.constant 0 : index
    %c0_2 = arith.constant 0 : index
    %2 = vector.load %arg2[%c0_1, %c0_2] : memref<9x64xbf16, #tpu.memory_space<vmem>>, vector<9x64xbf16>
    %cst = arith.constant dense<0.000000e+00> : vector<512x64xf32>
    %3 = tpu.matmul %1, %2, %cst {dimension_numbers = #tpu.dot_dimension_numbers<[1], [0], [0], [1], [0, 0, 1, 1], [], []>} : vector<512x9xbf16>, vector<9x64xbf16>, vector<512x64xf32> -> vector<512x64xf32>
    %c0_3 = arith.constant 0 : index
    %c0_4 = arith.constant 0 : index
    %4 = vector.load %arg3[%c0_3, %c0_4] : memref<1x64xf32, #tpu.memory_space<vmem>>, vector<1x64xf32>
    %5 = vector.broadcast %4 : vector<1x64xf32> to vector<512x64xf32>
    %6 = arith.addf %3, %5 : vector<512x64xf32>
    %cst_5 = arith.constant 0.000000e+00 : f32
    %7 = vector.broadcast %cst_5 : f32 to vector<512x64xf32>
    %8 = arith.maximumf %6, %7 : vector<512x64xf32>
    %9 = arith.truncf %8 : vector<512x64xf32> to vector<512x64xbf16>
    %c0_6 = arith.constant 0 : index
    %c0_7 = arith.constant 0 : index
    %10 = vector.load %arg4[%c0_6, %c0_7] : memref<64x32xbf16, #tpu.memory_space<vmem>>, vector<64x32xbf16>
    %cst_8 = arith.constant dense<0.000000e+00> : vector<512x32xf32>
    %11 = tpu.matmul %9, %10, %cst_8 {dimension_numbers = #tpu.dot_dimension_numbers<[1], [0], [0], [1], [0, 0, 1, 1], [], []>} : vector<512x64xbf16>, vector<64x32xbf16>, vector<512x32xf32> -> vector<512x32xf32>
    %c0_9 = arith.constant 0 : index
    %c0_10 = arith.constant 0 : index
    %12 = vector.load %arg5[%c0_9, %c0_10] : memref<1x32xf32, #tpu.memory_space<vmem>>, vector<1x32xf32>
    %13 = vector.broadcast %12 : vector<1x32xf32> to vector<512x32xf32>
    %14 = arith.addf %11, %13 : vector<512x32xf32>
    %cst_11 = arith.constant 0.000000e+00 : f32
    %15 = vector.broadcast %cst_11 : f32 to vector<512x32xf32>
    %16 = arith.maximumf %14, %15 : vector<512x32xf32>
    %17 = arith.truncf %16 : vector<512x32xf32> to vector<512x32xbf16>
    %c0_12 = arith.constant 0 : index
    %c0_13 = arith.constant 0 : index
    %18 = vector.load %arg6[%c0_12, %c0_13] : memref<32x32xbf16, #tpu.memory_space<vmem>>, vector<32x32xbf16>
    %cst_14 = arith.constant dense<0.000000e+00> : vector<512x32xf32>
    %19 = tpu.matmul %17, %18, %cst_14 {dimension_numbers = #tpu.dot_dimension_numbers<[1], [0], [0], [1], [0, 0, 1, 1], [], []>} : vector<512x32xbf16>, vector<32x32xbf16>, vector<512x32xf32> -> vector<512x32xf32>
    %c0_15 = arith.constant 0 : index
    %c0_16 = arith.constant 0 : index
    %20 = vector.load %arg7[%c0_15, %c0_16] : memref<1x32xf32, #tpu.memory_space<vmem>>, vector<1x32xf32>
    %21 = vector.broadcast %20 : vector<1x32xf32> to vector<512x32xf32>
    %22 = arith.addf %19, %21 : vector<512x32xf32>
    %23 = arith.truncf %6 : vector<512x64xf32> to vector<512x64xbf16>
    %c0_17 = arith.constant 0 : index
    %c0_18 = arith.constant 0 : index
    %24 = vector.load %arg8[%c0_17, %c0_18] : memref<64x32xbf16, #tpu.memory_space<vmem>>, vector<64x32xbf16>
    %cst_19 = arith.constant dense<0.000000e+00> : vector<512x32xf32>
    %25 = tpu.matmul %23, %24, %cst_19 {dimension_numbers = #tpu.dot_dimension_numbers<[1], [0], [0], [1], [0, 0, 1, 1], [], []>} : vector<512x64xbf16>, vector<64x32xbf16>, vector<512x32xf32> -> vector<512x32xf32>
    %26 = arith.addf %25, %22 : vector<512x32xf32>
    %27 = arith.truncf %26 : vector<512x32xf32> to vector<512x32xbf16>
    %c0_20 = arith.constant 0 : index
    %c0_21 = arith.constant 0 : index
    %28 = vector.load %arg9[%c0_20, %c0_21] : memref<512x32xbf16, #tpu.memory_space<vmem>>, vector<512x32xbf16>
    tpu.vector_store %arg9[%c0_20, %c0_21], %27 {strides = array<i32>} : memref<512x32xbf16, #tpu.memory_space<vmem>>, vector<512x32xbf16>,
    return
  }
  func.func @transform_0(%arg0: i32) -> (i32, i32) {
    %c0_i32 = arith.constant 0 : i32
    %c0_i32_0 = arith.constant 0 : i32
    return %arg0, %c0_i32 : i32, i32
  }
  func.func @transform_1(%arg0: i32) -> (i32, i32) {
    %c0_i32 = arith.constant 0 : i32
    %c0_i32_0 = arith.constant 0 : i32
    %c0_i32_1 = arith.constant 0 : i32
    return %c0_i32, %c0_i32_0 : i32, i32
  }
  func.func @transform_2(%arg0: i32) -> (i32, i32) {
    %c0_i32 = arith.constant 0 : i32
    %c0_i32_0 = arith.constant 0 : i32
    %c0_i32_1 = arith.constant 0 : i32
    return %c0_i32, %c0_i32_0 : i32, i32
  }
  func.func @transform_3(%arg0: i32) -> (i32, i32) {
    %c0_i32 = arith.constant 0 : i32
    %c0_i32_0 = arith.constant 0 : i32
    %c0_i32_1 = arith.constant 0 : i32
    return %c0_i32, %c0_i32_0 : i32, i32
  }
  func.func @transform_4(%arg0: i32) -> (i32, i32) {
    %c0_i32 = arith.constant 0 : i32
    %c0_i32_0 = arith.constant 0 : i32
    %c0_i32_1 = arith.constant 0 : i32
    return %c0_i32, %c0_i32_0 : i32, i32
  }
  func.func @transform_5(%arg0: i32) -> (i32, i32) {
    %c0_i32 = arith.constant 0 : i32
    %c0_i32_0 = arith.constant 0 : i32
    %c0_i32_1 = arith.constant 0 : i32
    return %c0_i32, %c0_i32_0 : i32, i32
  }
  func.func @transform_6(%arg0: i32) -> (i32, i32) {
    %c0_i32 = arith.constant 0 : i32
    %c0_i32_0 = arith.constant 0 : i32
    %c0_i32_1 = arith.constant 0 : i32
    return %c0_i32, %c0_i32_0 : i32, i32
  }
  func.func @transform_7(%arg0: i32) -> (i32, i32) {
    %c0_i32 = arith.constant 0 : i32
    %c0_i32_0 = arith.constant 0 : i32
    %c0_i32_1 = arith.constant 0 : i32
    return %c0_i32, %c0_i32_0 : i32, i32
  }
  func.func @transform_8(%arg0: i32) -> (i32, i32) {
    %c0_i32 = arith.constant 0 : i32
    %c0_i32_0 = arith.constant 0 : i32
    return %arg0, %c0_i32 : i32, i32
  }
}

</mosaic_0001>

<llo_original>
// kernel: tpu_custom_call.1
$region0: #{tpu_custom_call.1}
  #allocation0 [shape = 'u32[]', space=smem, size = 0x4, offset = 0x4, fixed_abs, tag = 'smem constant byte address 0x4 - core index']
  #allocation1 [shape = 'u32[72,128]{1,0:T(1,128)}', space=vmem, size = 0x9000, scoped, tag = 'internal scratch']
  %s0 = inlined_call_operand.vmem [shape: f32[1024,9], index: 0, kind: input, shape index: {}]
  %s1 = inlined_call_operand.vmem [shape: bf16[9,64], index: 1, kind: input, shape index: {}]
  %s2 = inlined_call_operand.vmem [shape: f32[1,64], index: 2, kind: input, shape index: {}]
  %s3 = inlined_call_operand.vmem [shape: bf16[64,32], index: 3, kind: input, shape index: {}]
  %s4 = inlined_call_operand.vmem [shape: f32[1,32], index: 4, kind: input, shape index: {}]
  %s5 = inlined_call_operand.vmem [shape: bf16[32,32], index: 5, kind: input, shape index: {}]
  %s6 = inlined_call_operand.vmem [shape: f32[1,32], index: 6, kind: input, shape index: {}]
  %s7 = inlined_call_operand.vmem [shape: bf16[64,32], index: 7, kind: input, shape index: {}]
  %s8 = inlined_call_operand.vmem [shape: bf16[1024,32], index: 8, kind: output, shape index: {}]
  %s9 = sld [smem:[#allocation0]]
  $region65: #{tpu_custom_call.1} parent=0
    _
  %s11 = ssub.s32 1, %s9
  %s12 = scalar_select 0, %s11, %s9
  loop: start=0, step=1, limit=4
  $region2: #{tpu_custom_call.1} parent=0 // loop_pre_header
    _
  $region3: #{tpu_custom_call.1} parent=0 // loop_header
    %s14 = sphi 0, %s18
    %p15 = scmp.ge.s32.totalorder %s14, 4
    %s24 = sphi 0, %s26
    %s27 = sphi 0, %s24
    %s28 = sphi 0, %s27
    %s44 = sphi 0, %s28
    %s48 = sphi 0, %s48
    %s50 = sphi 0, %s48
    %s51 = sphi 0, %s50
    %s65 = sphi 0, %s51
    %s69 = sphi 0, %s69
    %s71 = sphi 0, %s69
    %s72 = sphi 0, %s71
    %s86 = sphi 0, %s72
    %s90 = sphi 0, %s90
    %s92 = sphi 0, %s90
    %s93 = sphi 0, %s92
    %s107 = sphi 0, %s93
    %s111 = sphi 0, %s111
    %s113 = sphi 0, %s111
    %s114 = sphi 0, %s113
    %s128 = sphi 0, %s114
    %s132 = sphi 0, %s132
    %s134 = sphi 0, %s132
    %s135 = sphi 0, %s134
    %s149 = sphi 0, %s135
    %s153 = sphi 0, %s153
    %s155 = sphi 0, %s153
    %s156 = sphi 0, %s155
    %s170 = sphi 0, %s156
    %s174 = sphi 0, %s174
    %s176 = sphi 0, %s174
    %s177 = sphi 0, %s176
    %s191 = sphi 0, %s177
    %s197 = sphi 0, %s199
    %s200 = sphi 0, %s197
    %s201 = sphi 0, %s200
    %s217 = sphi 0, %s201
  $region4: #{tpu_custom_call.1} parent=0 // loop_header_branch
    %17 = sbr.rel (%p15) target = $region8
  $region5: #{tpu_custom_call.1} parent=0 // loop_body
    %s19 = ssub.s32 %s14, 1
    %s20 = ssub.s32 %s14, 2
    %s21 = sadd.s32 %s14, 1
    %s22 = ssub.s32 %s14, %s21
    %p23 = scmp.eq.s32.totalorder %s22, 0
    %s25 = sadd.s32 %s24, 1
    %s26 = scalar_select %p23, %s24, %s25
    %p29 = pneg %p23
    %p30 = scmp.eq.s32.totalorder %s14, 1
    %p31 = por %p29, %p30
    %p32 = scmp.ne.s32.totalorder %s24, %s27
    %p33 = scmp.eq.s32.totalorder %s14, 0
    %p34 = por %p32, %p33
    %p35 = scmp.ne.s32.totalorder %s24, %s27
    %p36 = scmp.eq.s32.totalorder %s19, 1
    %p37 = por %p35, %p36
    %p38 = scmp.ne.s32.totalorder %s27, %s28
    %p39 = scmp.eq.s32.totalorder %s19, 0
    %p40 = por %p38, %p39
    %p41 = scmp.ne.s32.totalorder %s27, %s28
    %p42 = scmp.eq.s32.totalorder %s20, 1
    %p43 = por %p41, %p42
    %p45 = scmp.ne.s32.totalorder %s28, %s44
    %p46 = scmp.eq.s32.totalorder %s20, 0
    %p47 = por %p45, %p46
    %s49 = sadd.s32 %s48, 1
    %p52 = scmp.eq.s32.totalorder %s14, 1
    %p53 = scmp.ne.s32.totalorder %s48, %s50
    %p54 = scmp.eq.s32.totalorder %s14, 0
    %p55 = por %p53, %p54
    %p56 = scmp.ne.s32.totalorder %s48, %s50
    %p57 = scmp.eq.s32.totalorder %s19, 1
    %p58 = por %p56, %p57
    %p59 = scmp.ne.s32.totalorder %s50, %s51
    %p60 = scmp.eq.s32.totalorder %s19, 0
    %p61 = por %p59, %p60
    %p62 = scmp.ne.s32.totalorder %s50, %s51
    %p63 = scmp.eq.s32.totalorder %s20, 1
    %p64 = por %p62, %p63
    %p66 = scmp.ne.s32.totalorder %s51, %s65
    %p67 = scmp.eq.s32.totalorder %s20, 0
    %p68 = por %p66, %p67
    %s70 = sadd.s32 %s69, 1
    %p73 = scmp.eq.s32.totalorder %s14, 1
    %p74 = scmp.ne.s32.totalorder %s69, %s71
    %p75 = scmp.eq.s32.totalorder %s14, 0
    %p76 = por %p74, %p75
    %p77 = scmp.ne.s32.totalorder %s69, %s71
    %p78 = scmp.eq.s32.totalorder %s19, 1
    %p79 = por %p77, %p78
    %p80 = scmp.ne.s32.totalorder %s71, %s72
    %p81 = scmp.eq.s32.totalorder %s19, 0
    %p82 = por %p80, %p81
    %p83 = scmp.ne.s32.totalorder %s71, %s72
    %p84 = scmp.eq.s32.totalorder %s20, 1
    %p85 = por %p83, %p84
    %p87 = scmp.ne.s32.totalorder %s72, %s86
    %p88 = scmp.eq.s32.totalorder %s20, 0
    %p89 = por %p87, %p88
    %s91 = sadd.s32 %s90, 1
    %p94 = scmp.eq.s32.totalorder %s14, 1
    %p95 = scmp.ne.s32.totalorder %s90, %s92
    %p96 = scmp.eq.s32.totalorder %s14, 0
    %p97 = por %p95, %p96
    %p98 = scmp.ne.s32.totalorder %s90, %s92
    %p99 = scmp.eq.s32.totalorder %s19, 1
    %p100 = por %p98, %p99
    %p101 = scmp.ne.s32.totalorder %s92, %s93
    %p102 = scmp.eq.s32.totalorder %s19, 0
    %p103 = por %p101, %p102
    %p104 = scmp.ne.s32.totalorder %s92, %s93
    %p105 = scmp.eq.s32.totalorder %s20, 1
    %p106 = por %p104, %p105
    %p108 = scmp.ne.s32.totalorder %s93, %s107
    %p109 = scmp.eq.s32.totalorder %s20, 0
    %p110 = por %p108, %p109
    %s112 = sadd.s32 %s111, 1
    %p115 = scmp.eq.s32.totalorder %s14, 1
    %p116 = scmp.ne.s32.totalorder %s111, %s113
    %p117 = scmp.eq.s32.totalorder %s14, 0
    %p118 = por %p116, %p117
    %p119 = scmp.ne.s32.totalorder %s111, %s113
    %p120 = scmp.eq.s32.totalorder %s19, 1
    %p121 = por %p119, %p120
    %p122 = scmp.ne.s32.totalorder %s113, %s114
    %p123 = scmp.eq.s32.totalorder %s19, 0
    %p124 = por %p122, %p123
    %p125 = scmp.ne.s32.totalorder %s113, %s114
    %p126 = scmp.eq.s32.totalorder %s20, 1
    %p127 = por %p125, %p126
    %p129 = scmp.ne.s32.totalorder %s114, %s128
    %p130 = scmp.eq.s32.totalorder %s20, 0
    %p131 = por %p129, %p130
    %s133 = sadd.s32 %s132, 1
    %p136 = scmp.eq.s32.totalorder %s14, 1
    %p137 = scmp.ne.s32.totalorder %s132, %s134
    %p138 = scmp.eq.s32.totalorder %s14, 0
    %p139 = por %p137, %p138
    %p140 = scmp.ne.s32.totalorder %s132, %s134
    %p141 = scmp.eq.s32.totalorder %s19, 1
    %p142 = por %p140, %p141
    %p143 = scmp.ne.s32.totalorder %s134, %s135
    %p144 = scmp.eq.s32.totalorder %s19, 0
    %p145 = por %p143, %p144
    %p146 = scmp.ne.s32.totalorder %s134, %s135
    %p147 = scmp.eq.s32.totalorder %s20, 1
    %p148 = por %p146, %p147
    %p150 = scmp.ne.s32.totalorder %s135, %s149
    %p151 = scmp.eq.s32.totalorder %s20, 0
    %p152 = por %p150, %p151
    %s154 = sadd.s32 %s153, 1
    %p157 = scmp.eq.s32.totalorder %s14, 1
    %p158 = scmp.ne.s32.totalorder %s153, %s155
    %p159 = scmp.eq.s32.totalorder %s14, 0
    %p160 = por %p158, %p159
    %p161 = scmp.ne.s32.totalorder %s153, %s155
    %p162 = scmp.eq.s32.totalorder %s19, 1
    %p163 = por %p161, %p162
    %p164 = scmp.ne.s32.totalorder %s155, %s156
    %p165 = scmp.eq.s32.totalorder %s19, 0
    %p166 = por %p164, %p165
    %p167 = scmp.ne.s32.totalorder %s155, %s156
    %p168 = scmp.eq.s32.totalorder %s20, 1
    %p169 = por %p167, %p168
    %p171 = scmp.ne.s32.totalorder %s156, %s170
    %p172 = scmp.eq.s32.totalorder %s20, 0
    %p173 = por %p171, %p172
    %s175 = sadd.s32 %s174, 1
    %p178 = scmp.eq.s32.totalorder %s14, 1
    %p179 = scmp.ne.s32.totalorder %s174, %s176
    %p180 = scmp.eq.s32.totalorder %s14, 0
    %p181 = por %p179, %p180
    %p182 = scmp.ne.s32.totalorder %s174, %s176
    %p183 = scmp.eq.s32.totalorder %s19, 1
    %p184 = por %p182, %p183
    %p185 = scmp.ne.s32.totalorder %s176, %s177
    %p186 = scmp.eq.s32.totalorder %s19, 0
    %p187 = por %p185, %p186
    %p188 = scmp.ne.s32.totalorder %s176, %s177
    %p189 = scmp.eq.s32.totalorder %s20, 1
    %p190 = por %p188, %p189
    %p192 = scmp.ne.s32.totalorder %s177, %s191
    %p193 = scmp.eq.s32.totalorder %s20, 0
    %p194 = por %p192, %p193
    %s195 = ssub.s32 %s14, %s21
    %p196 = scmp.eq.s32.totalorder %s195, 0
    %s198 = sadd.s32 %s197, 1
    %s199 = scalar_select %p196, %s197, %s198
    %p202 = pneg %p196
    %p203 = scmp.eq.s32.totalorder %s14, 1
    %p204 = por %p202, %p203
    %p205 = scmp.ne.s32.totalorder %s197, %s200
    %p206 = scmp.eq.s32.totalorder %s14, 0
    %p207 = por %p205, %p206
    %p208 = scmp.ne.s32.totalorder %s197, %s200
    %p209 = scmp.eq.s32.totalorder %s19, 1
    %p210 = por %p208, %p209
    %p211 = scmp.ne.s32.totalorder %s200, %s201
    %p212 = scmp.eq.s32.totalorder %s19, 0
    %p213 = por %p211, %p212
    %p214 = scmp.ne.s32.totalorder %s200, %s201
    %p215 = scmp.eq.s32.totalorder %s20, 1
    %p216 = por %p214, %p215
    %p218 = scmp.ne.s32.totalorder %s201, %s217
    %p219 = scmp.eq.s32.totalorder %s20, 0
    %p220 = por %p218, %p219
    %p221 = scmp.le.s32.totalorder 1, %s14
    %p222 = scmp.lt.s32.totalorder %s14, 3
    %p223 = pnand %p221, %p222
    %p224 = pneg %p223
    // Predicated region
    $region9: #{tpu_custom_call.1} parent=5 // pred_check
      _
    $region10: #{tpu_custom_call.1} parent=5 // pred_check_branch
      %226 = sbr.rel (%p223) target = $region12
    $region11: #{tpu_custom_call.1} parent=5 // pred_region
      %s227 = ssub.s32 %s14, 1
      // Predicated region
      $region13: #{tpu_custom_call.1} parent=11 // pred_check
        %p228 = pneg %p61
      $region14: #{tpu_custom_call.1} parent=11 // pred_check_branch
        %230 = sbr.rel (%p228) target = $region16
      $region15: #{tpu_custom_call.1} parent=11 // pred_region
        _
      $region16: #{tpu_custom_call.1} parent=11 // pred_fallthru
        _
      // Predicated region
      $region17: #{tpu_custom_call.1} parent=11 // pred_check
        %p231 = pneg %p82
      $region18: #{tpu_custom_call.1} parent=11 // pred_check_branch
        %233 = sbr.rel (%p231) target = $region20
      $region19: #{tpu_custom_call.1} parent=11 // pred_region
        _
      $region20: #{tpu_custom_call.1} parent=11 // pred_fallthru
        _
      // Predicated region
      $region21: #{tpu_custom_call.1} parent=11 // pred_check
        %p234 = pneg %p103
      $region22: #{tpu_custom_call.1} parent=11 // pred_check_branch
        %236 = sbr.rel (%p234) target = $region24
      $region23: #{tpu_custom_call.1} parent=11 // pred_region
        _
      $region24: #{tpu_custom_call.1} parent=11 // pred_fallthru
        _
      // Predicated region
      $region25: #{tpu_custom_call.1} parent=11 // pred_check
        %p237 = pneg %p124
      $region26: #{tpu_custom_call.1} parent=11 // pred_check_branch
        %239 = sbr.rel (%p237) target = $region28
      $region27: #{tpu_custom_call.1} parent=11 // pred_region
        _
      $region28: #{tpu_custom_call.1} parent=11 // pred_fallthru
        _
      // Predicated region
      $region29: #{tpu_custom_call.1} parent=11 // pred_check
        %p240 = pneg %p145
      $region30: #{tpu_custom_call.1} parent=11 // pred_check_branch
        %242 = sbr.rel (%p240) target = $region32
      $region31: #{tpu_custom_call.1} parent=11 // pred_region
        _
      $region32: #{tpu_custom_call.1} parent=11 // pred_fallthru
        _
      // Predicated region
      $region33: #{tpu_custom_call.1} parent=11 // pred_check
        %p243 = pneg %p166
      $region34: #{tpu_custom_call.1} parent=11 // pred_check_branch
        %245 = sbr.rel (%p243) target = $region36
      $region35: #{tpu_custom_call.1} parent=11 // pred_region
        _
      $region36: #{tpu_custom_call.1} parent=11 // pred_fallthru
        _
      // Predicated region
      $region37: #{tpu_custom_call.1} parent=11 // pred_check
        %p246 = pneg %p187
      $region38: #{tpu_custom_call.1} parent=11 // pred_check_branch
        %248 = sbr.rel (%p246) target = $region40
      $region39: #{tpu_custom_call.1} parent=11 // pred_region
        _
      $region40: #{tpu_custom_call.1} parent=11 // pred_fallthru
        _
    $region12: #{tpu_custom_call.1} parent=5 // pred_fallthru
      _
    %p249 = scmp.lt.s32.totalorder %s14, 2
    // Predicated region
    $region41: #{tpu_custom_call.1} parent=5 // pred_check
      %p250 = pneg %p249
    $region42: #{tpu_custom_call.1} parent=5 // pred_check_branch
      %252 = sbr.rel (%p250) target = $region44
    $region43: #{tpu_custom_call.1} parent=5 // pred_region
      // Predicated region
      $region45: #{tpu_custom_call.1} parent=43 // pred_check
        %p253 = pneg %p34
      $region46: #{tpu_custom_call.1} parent=43 // pred_check_branch
        %255 = sbr.rel (%p253) target = $region48
      $region47: #{tpu_custom_call.1} parent=43 // pred_region
        %s256 = smul.u32 64, %s14
        %p257 = scmp.lt.s32.totalorder %s256, 127
        %s258 = scalar_select %p257, %s256, 127
        %s259 = smul.addr %s258, 8
        %s260 = scalar_lea.vmem %s0, %s259
        %s261 = smul.u32 64, %s14
      $region48: #{tpu_custom_call.1} parent=43 // pred_fallthru
        _
    $region44: #{tpu_custom_call.1} parent=5 // pred_fallthru
      _
    %p262 = scmp.le.s32.totalorder 1, %s14
    %p263 = scmp.lt.s32.totalorder %s14, 3
    %p264 = pnand %p262, %p263
    %p265 = pneg %p264
    // Predicated region
    $region49: #{tpu_custom_call.1} parent=5 // pred_check
      _
    $region50: #{tpu_custom_call.1} parent=5 // pred_check_branch
      %267 = sbr.rel (%p264) target = $region52
    $region51: #{tpu_custom_call.1} parent=5 // pred_region
      %s268 = ssub.s32 %s14, 1
      %s269 = smul.u32 64, %s19
      %p270 = scmp.lt.s32.totalorder %s269, 127
      %s271 = scalar_select %p270, %s269, 127
      %s272 = smul.addr %s271, 8
      %s273 = scalar_lea.vmem %s0, %s272
      %p274 = pneg %p40
      %p275 = pneg %p37
      %p276 = pneg %p61
      %p277 = pneg %p58
      %p278 = pneg %p82
      %p279 = pneg %p79
      %p280 = pneg %p103
      %p281 = pneg %p100
      %p282 = pneg %p124
      %p283 = pneg %p121
      %p284 = pneg %p145
      %p285 = pneg %p142
      %p286 = pneg %p166
      %p287 = pneg %p163
      %p288 = pneg %p187
      %p289 = pneg %p184
      %p290 = pneg %p213
      %p291 = pneg %p210
      %s292 = smul.u32 64, %s19
      %p293 = scmp.lt.s32.totalorder %s292, 127
      %s294 = scalar_select %p293, %s292, 127
      %s295 = smul.addr %s294, 4
      %s296 = scalar_lea.vmem %s8, %s295
      %s297 = smul.u32 64, %s19
      %p298 = scmp.lt.s32.totalorder %s297, 127
      %s299 = scalar_select %p298, %s297, 127
      %s300 = smul.addr %s299, 8
      %s301 = scalar_lea.vmem %s0, %s300
      %s302 = smul.u32 64, %s19
      %s303 = smul.u32 64, %s19
      %p304 = scmp.lt.s32.totalorder %s303, 127
      %s305 = scalar_select %p304, %s303, 127
      %s306 = smul.addr %s305, 4
      %s307 = scalar_lea.vmem %s8, %s306
      %s308 = smul.u32 64, %s19
      %v310 = vld [vmem:[%s301] sm:$0xff]
      %v311 = vld [vmem:[%s301 + $0x8] sm:$0xff]
      %v312 = vld [vmem:[%s301 + $0x10] sm:$0xff]
      %v313 = vld [vmem:[%s301 + $0x18] sm:$0xff]
      %v314 = vld [vmem:[%s301 + $0x20] sm:$0xff]
      %v315 = vld [vmem:[%s301 + $0x28] sm:$0xff]
      %v316 = vld [vmem:[%s301 + $0x30] sm:$0xff]
      %v317 = vld [vmem:[%s301 + $0x38] sm:$0xff]
      %v318 = vld [vmem:[%s301 + $0x40] sm:$0xff]
      %v319 = vld [vmem:[%s301 + $0x48] sm:$0xff]
      %v320 = vld [vmem:[%s301 + $0x50] sm:$0xff]
      %v321 = vld [vmem:[%s301 + $0x58] sm:$0xff]
      %v322 = vld [vmem:[%s301 + $0x60] sm:$0xff]
      %v323 = vld [vmem:[%s301 + $0x68] sm:$0xff]
      %v324 = vld [vmem:[%s301 + $0x70] sm:$0xff]
      %v325 = vld [vmem:[%s301 + $0x78] sm:$0xff]
      %v326 = vld [vmem:[%s301 + $0x80] sm:$0xff]
      %v327 = vld [vmem:[%s301 + $0x88] sm:$0xff]
      %v328 = vld [vmem:[%s301 + $0x90] sm:$0xff]
      %v329 = vld [vmem:[%s301 + $0x98] sm:$0xff]
      %v330 = vld [vmem:[%s301 + $0xa0] sm:$0xff]
      %v331 = vld [vmem:[%s301 + $0xa8] sm:$0xff]
      %v332 = vld [vmem:[%s301 + $0xb0] sm:$0xff]
      %v333 = vld [vmem:[%s301 + $0xb8] sm:$0xff]
      %v334 = vld [vmem:[%s301 + $0xc0] sm:$0xff]
      %v335 = vld [vmem:[%s301 + $0xc8] sm:$0xff]
      %v336 = vld [vmem:[%s301 + $0xd0] sm:$0xff]
      %v337 = vld [vmem:[%s301 + $0xd8] sm:$0xff]
      %v338 = vld [vmem:[%s301 + $0xe0] sm:$0xff]
      %v339 = vld [vmem:[%s301 + $0xe8] sm:$0xff]
      %v340 = vld [vmem:[%s301 + $0xf0] sm:$0xff]
      %v341 = vld [vmem:[%s301 + $0xf8] sm:$0xff]
      %v342 = vld [vmem:[%s301 + $0x100] sm:$0xff]
      %v343 = vld [vmem:[%s301 + $0x108] sm:$0xff]
      %v344 = vld [vmem:[%s301 + $0x110] sm:$0xff]
      %v345 = vld [vmem:[%s301 + $0x118] sm:$0xff]
      %v346 = vld [vmem:[%s301 + $0x120] sm:$0xff]
      %v347 = vld [vmem:[%s301 + $0x128] sm:$0xff]
      %v348 = vld [vmem:[%s301 + $0x130] sm:$0xff]
      %v349 = vld [vmem:[%s301 + $0x138] sm:$0xff]
      %v350 = vld [vmem:[%s301 + $0x140] sm:$0xff]
      %v351 = vld [vmem:[%s301 + $0x148] sm:$0xff]
      %v352 = vld [vmem:[%s301 + $0x150] sm:$0xff]
      %v353 = vld [vmem:[%s301 + $0x158] sm:$0xff]
      %v354 = vld [vmem:[%s301 + $0x160] sm:$0xff]
      %v355 = vld [vmem:[%s301 + $0x168] sm:$0xff]
      %v356 = vld [vmem:[%s301 + $0x170] sm:$0xff]
      %v357 = vld [vmem:[%s301 + $0x178] sm:$0xff]
      %v358 = vld [vmem:[%s301 + $0x180] sm:$0xff]
      %v359 = vld [vmem:[%s301 + $0x188] sm:$0xff]
      %v360 = vld [vmem:[%s301 + $0x190] sm:$0xff]
      %v361 = vld [vmem:[%s301 + $0x198] sm:$0xff]
      %v362 = vld [vmem:[%s301 + $0x1a0] sm:$0xff]
      %v363 = vld [vmem:[%s301 + $0x1a8] sm:$0xff]
      %v364 = vld [vmem:[%s301 + $0x1b0] sm:$0xff]
      %v365 = vld [vmem:[%s301 + $0x1b8] sm:$0xff]
      %v366 = vld [vmem:[%s301 + $0x1c0] sm:$0xff]
      %v367 = vld [vmem:[%s301 + $0x1c8] sm:$0xff]
      %v368 = vld [vmem:[%s301 + $0x1d0] sm:$0xff]
      %v369 = vld [vmem:[%s301 + $0x1d8] sm:$0xff]
      %v370 = vld [vmem:[%s301 + $0x1e0] sm:$0xff]
      %v371 = vld [vmem:[%s301 + $0x1e8] sm:$0xff]
      %v372 = vld [vmem:[%s301 + $0x1f0] sm:$0xff]
      %v373 = vld [vmem:[%s301 + $0x1f8] sm:$0xff]
      %v374 = vpack.c.bf16 %v311, %v310
      %v375 = vpack.c.bf16 %v313, %v312
      %v376 = vpack.c.bf16 %v315, %v314
      %v377 = vpack.c.bf16 %v317, %v316
      %v378 = vpack.c.bf16 %v319, %v318
      %v379 = vpack.c.bf16 %v321, %v320
      %v380 = vpack.c.bf16 %v323, %v322
      %v381 = vpack.c.bf16 %v325, %v324
      %v382 = vpack.c.bf16 %v327, %v326
      %v383 = vpack.c.bf16 %v329, %v328
      %v384 = vpack.c.bf16 %v331, %v330
      %v385 = vpack.c.bf16 %v333, %v332
      %v386 = vpack.c.bf16 %v335, %v334
      %v387 = vpack.c.bf16 %v337, %v336
      %v388 = vpack.c.bf16 %v339, %v338
      %v389 = vpack.c.bf16 %v341, %v340
      %v390 = vpack.c.bf16 %v343, %v342
      %v391 = vpack.c.bf16 %v345, %v344
      %v392 = vpack.c.bf16 %v347, %v346
      %v393 = vpack.c.bf16 %v349, %v348
      %v394 = vpack.c.bf16 %v351, %v350
      %v395 = vpack.c.bf16 %v353, %v352
      %v396 = vpack.c.bf16 %v355, %v354
      %v397 = vpack.c.bf16 %v357, %v356
      %v398 = vpack.c.bf16 %v359, %v358
      %v399 = vpack.c.bf16 %v361, %v360
      %v400 = vpack.c.bf16 %v363, %v362
      %v401 = vpack.c.bf16 %v365, %v364
      %v402 = vpack.c.bf16 %v367, %v366
      %v403 = vpack.c.bf16 %v369, %v368
      %v404 = vpack.c.bf16 %v371, %v370
      %v405 = vpack.c.bf16 %v373, %v372
      %v406 = vld [vmem:[%s1] sm:$0xf]
      %v407 = vld [vmem:[%s1 + $0x4] sm:$0x1]
      %v408 = vld [vmem:[%s2] sm:$0x1]
      %v410 = vperm.slane %v408, 0
      %v414 = vunpack.c.l.b16 %v406
      %v415 = vunpack.c.l.b16 %v407
      %v416 = vpack.c.b16 %v415, %v414
      %vm417 = vcmask 72704
      %v419 = vsel %vm417, %v374, 0
      %v422 = vsel %vm417, %v375, 0
      %v425 = vsel %vm417, %v376, 0
      %v428 = vsel %vm417, %v377, 0
      %v431 = vsel %vm417, %v378, 0
      %v434 = vsel %vm417, %v379, 0
      %v437 = vsel %vm417, %v380, 0
      %v440 = vsel %vm417, %v381, 0
      %v443 = vsel %vm417, %v382, 0
      %v446 = vsel %vm417, %v383, 0
      %v449 = vsel %vm417, %v384, 0
      %v452 = vsel %vm417, %v385, 0
      %v455 = vsel %vm417, %v386, 0
      %v458 = vsel %vm417, %v387, 0
      %v461 = vsel %vm417, %v388, 0
      %v464 = vsel %vm417, %v389, 0
      %v467 = vsel %vm417, %v390, 0
      %v470 = vsel %vm417, %v391, 0
      %v473 = vsel %vm417, %v392, 0
      %v476 = vsel %vm417, %v393, 0
      %v479 = vsel %vm417, %v394, 0
      %v482 = vsel %vm417, %v395, 0
      %v485 = vsel %vm417, %v396, 0
      %v488 = vsel %vm417, %v397, 0
      %v491 = vsel %vm417, %v398, 0
      %v494 = vsel %vm417, %v399, 0
      %v497 = vsel %vm417, %v400, 0
      %v500 = vsel %vm417, %v401, 0
      %v503 = vsel %vm417, %v402, 0
      %v506 = vsel %vm417, %v403, 0
      %v509 = vsel %vm417, %v404, 0
      %v512 = vsel %vm417, %v405, 0
      %vm514 = vcmask 1043456
      %vm515 = vcmask 1044480
      %v516 = vsel %vm514, 4294967295, 65535
      %v517 = vsel %vm515, %v516, 0
      %v519 = vand.u32 %v416, %v517
      %521 = vmatpush.bf16.msra.mxu0 0
      %522 = vmatpush.bf16.msra.mxu0 0
      %523 = vmatpush.bf16.msra.mxu0 0
      %524 = vmatpush.bf16.msra.mxu0 0
      %525 = vmatpush.bf16.msra.mxu0 0
      %526 = vmatpush.bf16.msra.mxu0 0
      %527 = vmatpush.bf16.msra.mxu0 0
      %528 = vmatpush.bf16.msra.mxu0 %v519
      %529 = vmatmul.bf16.gmra.mxu0 %v419
      %v530 = vpop.f32.mrf.mxu0
      %v531 = vadd.f32 %v410, %v530
      %v532 = vpop.f32.mrf.mxu0
      %v533 = vadd.f32 %v410, %v532
      %534 = vmatmul.bf16.gmra.mxu0 %v422
      %v535 = vpop.f32.mrf.mxu0
      %v536 = vadd.f32 %v410, %v535
      %v537 = vpop.f32.mrf.mxu0
      %v538 = vadd.f32 %v410, %v537
      %539 = vmatmul.bf16.gmra.mxu0 %v425
      %v540 = vpop.f32.mrf.mxu0
      %v541 = vadd.f32 %v410, %v540
      %v542 = vpop.f32.mrf.mxu0
      %v543 = vadd.f32 %v410, %v542
      %544 = vmatmul.bf16.gmra.mxu0 %v428
      %v545 = vpop.f32.mrf.mxu0
      %v546 = vadd.f32 %v410, %v545
      %v547 = vpop.f32.mrf.mxu0
      %v548 = vadd.f32 %v410, %v547
      %549 = vmatmul.bf16.gmra.mxu0 %v431
      %v550 = vpop.f32.mrf.mxu0
      %v551 = vadd.f32 %v410, %v550
      %v552 = vpop.f32.mrf.mxu0
      %v553 = vadd.f32 %v410, %v552
      %554 = vmatmul.bf16.gmra.mxu0 %v434
      %v555 = vpop.f32.mrf.mxu0
      %v556 = vadd.f32 %v410, %v555
      %v557 = vpop.f32.mrf.mxu0
      %v558 = vadd.f32 %v410, %v557
      %559 = vmatmul.bf16.gmra.mxu0 %v437
      %v560 = vpop.f32.mrf.mxu0
      %v561 = vadd.f32 %v410, %v560
      %v562 = vpop.f32.mrf.mxu0
      %v563 = vadd.f32 %v410, %v562
      %564 = vmatmul.bf16.gmra.mxu0 %v440
      %v565 = vpop.f32.mrf.mxu0
      %v566 = vadd.f32 %v410, %v565
      %v567 = vpop.f32.mrf.mxu0
      %v568 = vadd.f32 %v410, %v567
      %569 = vmatmul.bf16.gmra.mxu0 %v443
      %v570 = vpop.f32.mrf.mxu0
      %v571 = vadd.f32 %v410, %v570
      %v572 = vpop.f32.mrf.mxu0
      %v573 = vadd.f32 %v410, %v572
      %574 = vmatmul.bf16.gmra.mxu0 %v446
      %v575 = vpop.f32.mrf.mxu0
      %v576 = vadd.f32 %v410, %v575
      %v577 = vpop.f32.mrf.mxu0
      %v578 = vadd.f32 %v410, %v577
      %579 = vmatmul.bf16.gmra.mxu0 %v449
      %v580 = vpop.f32.mrf.mxu0
      %v581 = vadd.f32 %v410, %v580
      %v582 = vpop.f32.mrf.mxu0
      %v583 = vadd.f32 %v410, %v582
      %584 = vmatmul.bf16.gmra.mxu0 %v452
      %v585 = vpop.f32.mrf.mxu0
      %v586 = vadd.f32 %v410, %v585
      %v587 = vpop.f32.mrf.mxu0
      %v588 = vadd.f32 %v410, %v587
      %589 = vmatmul.bf16.gmra.mxu0 %v455
      %v590 = vpop.f32.mrf.mxu0
      %v591 = vadd.f32 %v410, %v590
      %v592 = vpop.f32.mrf.mxu0
      %v593 = vadd.f32 %v410, %v592
      %594 = vmatmul.bf16.gmra.mxu0 %v458
      %v595 = vpop.f32.mrf.mxu0
      %v596 = vadd.f32 %v410, %v595
      %v597 = vpop.f32.mrf.mxu0
      %v598 = vadd.f32 %v410, %v597
      %599 = vmatmul.bf16.gmra.mxu0 %v461
      %v600 = vpop.f32.mrf.mxu0
      %v601 = vadd.f32 %v410, %v600
      %v602 = vpop.f32.mrf.mxu0
      %v603 = vadd.f32 %v410, %v602
      %604 = vmatmul.bf16.gmra.mxu0 %v464
      %v605 = vpop.f32.mrf.mxu0
      %v606 = vadd.f32 %v410, %v605
      %v607 = vpop.f32.mrf.mxu0
      %v608 = vadd.f32 %v410, %v607
      %609 = vmatmul.bf16.gmra.mxu0 %v467
      %v610 = vpop.f32.mrf.mxu0
      %v611 = vadd.f32 %v410, %v610
      %v612 = vpop.f32.mrf.mxu0
      %v613 = vadd.f32 %v410, %v612
      %614 = vmatmul.bf16.gmra.mxu0 %v470
      %v615 = vpop.f32.mrf.mxu0
      %v616 = vadd.f32 %v410, %v615
      %v617 = vpop.f32.mrf.mxu0
      %v618 = vadd.f32 %v410, %v617
      %619 = vmatmul.bf16.gmra.mxu0 %v473
      %v620 = vpop.f32.mrf.mxu0
      %v621 = vadd.f32 %v410, %v620
      %v622 = vpop.f32.mrf.mxu0
      %v623 = vadd.f32 %v410, %v622
      %624 = vmatmul.bf16.gmra.mxu0 %v476
      %v625 = vpop.f32.mrf.mxu0
      %v626 = vadd.f32 %v410, %v625
      %v627 = vpop.f32.mrf.mxu0
      %v628 = vadd.f32 %v410, %v627
      %629 = vmatmul.bf16.gmra.mxu0 %v479
      %v630 = vpop.f32.mrf.mxu0
      %v631 = vadd.f32 %v410, %v630
      %v632 = vpop.f32.mrf.mxu0
      %v633 = vadd.f32 %v410, %v632
      %634 = vmatmul.bf16.gmra.mxu0 %v482
      %v635 = vpop.f32.mrf.mxu0
      %v636 = vadd.f32 %v410, %v635
      %v637 = vpop.f32.mrf.mxu0
      %v638 = vadd.f32 %v410, %v637
      %639 = vmatmul.bf16.gmra.mxu0 %v485
      %v640 = vpop.f32.mrf.mxu0
      %v641 = vadd.f32 %v410, %v640
      %v642 = vpop.f32.mrf.mxu0
      %v643 = vadd.f32 %v410, %v642
      %644 = vmatmul.bf16.gmra.mxu0 %v488
      %v645 = vpop.f32.mrf.mxu0
      %v646 = vadd.f32 %v410, %v645
      %v647 = vpop.f32.mrf.mxu0
      %v648 = vadd.f32 %v410, %v647
      %649 = vmatmul.bf16.gmra.mxu0 %v491
      %v650 = vpop.f32.mrf.mxu0
      %v651 = vadd.f32 %v410, %v650
      %v652 = vpop.f32.mrf.mxu0
      %v653 = vadd.f32 %v410, %v652
      %654 = vmatmul.bf16.gmra.mxu0 %v494
      %v655 = vpop.f32.mrf.mxu0
      %v656 = vadd.f32 %v410, %v655
      %v657 = vpop.f32.mrf.mxu0
      %v658 = vadd.f32 %v410, %v657
      %659 = vmatmul.bf16.gmra.mxu0 %v497
      %v660 = vpop.f32.mrf.mxu0
      %v661 = vadd.f32 %v410, %v660
      %v662 = vpop.f32.mrf.mxu0
      %v663 = vadd.f32 %v410, %v662
      %664 = vmatmul.bf16.gmra.mxu0 %v500
      %v665 = vpop.f32.mrf.mxu0
      %v666 = vadd.f32 %v410, %v665
      %v667 = vpop.f32.mrf.mxu0
      %v668 = vadd.f32 %v410, %v667
      %669 = vmatmul.bf16.gmra.mxu0 %v503
      %v670 = vpop.f32.mrf.mxu0
      %v671 = vadd.f32 %v410, %v670
      %v672 = vpop.f32.mrf.mxu0
      %v673 = vadd.f32 %v410, %v672
      %674 = vmatmul.bf16.gmra.mxu0 %v506
      %v675 = vpop.f32.mrf.mxu0
      %v676 = vadd.f32 %v410, %v675
      %v677 = vpop.f32.mrf.mxu0
      %v678 = vadd.f32 %v410, %v677
      %679 = vmatmul.bf16.gmra.mxu0 %v509
      %v680 = vpop.f32.mrf.mxu0
      %v681 = vadd.f32 %v410, %v680
      %v682 = vpop.f32.mrf.mxu0
      %v683 = vadd.f32 %v410, %v682
      %684 = vmatmul.bf16.gmra.mxu0 %v512
      %v685 = vpop.f32.mrf.mxu0
      %v686 = vadd.f32 %v410, %v685
      %v687 = vpop.f32.mrf.mxu0
      %v688 = vadd.f32 %v410, %v687
      %689 = vdwg.mxu0
      %v690 = vmax.f32 %v531, 0.0
      %v691 = vmax.f32 %v533, 0.0
      %v692 = vmax.f32 %v536, 0.0
      %v693 = vmax.f32 %v538, 0.0
      %v694 = vmax.f32 %v541, 0.0
      %v695 = vmax.f32 %v543, 0.0
      %v696 = vmax.f32 %v546, 0.0
      %v697 = vmax.f32 %v548, 0.0
      %v698 = vmax.f32 %v551, 0.0
      %v699 = vmax.f32 %v553, 0.0
      %v700 = vmax.f32 %v556, 0.0
      %v701 = vmax.f32 %v558, 0.0
      %v702 = vmax.f32 %v561, 0.0
      %v703 = vmax.f32 %v563, 0.0
      %v704 = vmax.f32 %v566, 0.0
      %v705 = vmax.f32 %v568, 0.0
      %v706 = vmax.f32 %v571, 0.0
      %v707 = vmax.f32 %v573, 0.0
      %v708 = vmax.f32 %v576, 0.0
      %v709 = vmax.f32 %v578, 0.0
      %v710 = vmax.f32 %v581, 0.0
      %v711 = vmax.f32 %v583, 0.0
      %v712 = vmax.f32 %v586, 0.0
      %v713 = vmax.f32 %v588, 0.0
      %v714 = vmax.f32 %v591, 0.0
      %v715 = vmax.f32 %v593, 0.0
      %v716 = vmax.f32 %v596, 0.0
      %v717 = vmax.f32 %v598, 0.0
      %v718 = vmax.f32 %v601, 0.0
      %v719 = vmax.f32 %v603, 0.0
      %v720 = vmax.f32 %v606, 0.0
      %v721 = vmax.f32 %v608, 0.0
      %v722 = vmax.f32 %v611, 0.0
      %v723 = vmax.f32 %v613, 0.0
      %v724 = vmax.f32 %v616, 0.0
      %v725 = vmax.f32 %v618, 0.0
      %v726 = vmax.f32 %v621, 0.0
      %v727 = vmax.f32 %v623, 0.0
      %v728 = vmax.f32 %v626, 0.0
      %v729 = vmax.f32 %v628, 0.0
      %v730 = vmax.f32 %v631, 0.0
      %v731 = vmax.f32 %v633, 0.0
      %v732 = vmax.f32 %v636, 0.0
      %v733 = vmax.f32 %v638, 0.0
      %v734 = vmax.f32 %v641, 0.0
      %v735 = vmax.f32 %v643, 0.0
      %v736 = vmax.f32 %v646, 0.0
      %v737 = vmax.f32 %v648, 0.0
      %v738 = vmax.f32 %v651, 0.0
      %v739 = vmax.f32 %v653, 0.0
      %v740 = vmax.f32 %v656, 0.0
      %v741 = vmax.f32 %v658, 0.0
      %v742 = vmax.f32 %v661, 0.0
      %v743 = vmax.f32 %v663, 0.0
      %v744 = vmax.f32 %v666, 0.0
      %v745 = vmax.f32 %v668, 0.0
      %v746 = vmax.f32 %v671, 0.0
      %v747 = vmax.f32 %v673, 0.0
      %v748 = vmax.f32 %v676, 0.0
      %v749 = vmax.f32 %v678, 0.0
      %v750 = vmax.f32 %v681, 0.0
      %v751 = vmax.f32 %v683, 0.0
      %v752 = vmax.f32 %v686, 0.0
      %v753 = vmax.f32 %v688, 0.0
      %v754 = vpack.c.bf16 %v691, %v690
      %v755 = vpack.c.bf16 %v693, %v692
      %v756 = vpack.c.bf16 %v695, %v694
      %v757 = vpack.c.bf16 %v697, %v696
      %v758 = vpack.c.bf16 %v699, %v698
      %v759 = vpack.c.bf16 %v701, %v700
      %v760 = vpack.c.bf16 %v703, %v702
      %v761 = vpack.c.bf16 %v705, %v704
      %v762 = vpack.c.bf16 %v707, %v706
      %v763 = vpack.c.bf16 %v709, %v708
      %v764 = vpack.c.bf16 %v711, %v710
      %v765 = vpack.c.bf16 %v713, %v712
      %v766 = vpack.c.bf16 %v715, %v714
      %v767 = vpack.c.bf16 %v717, %v716
      %v768 = vpack.c.bf16 %v719, %v718
      %v769 = vpack.c.bf16 %v721, %v720
      %v770 = vpack.c.bf16 %v723, %v722
      %v771 = vpack.c.bf16 %v725, %v724
      %v772 = vpack.c.bf16 %v727, %v726
      %v773 = vpack.c.bf16 %v729, %v728
      %v774 = vpack.c.bf16 %v731, %v730
      %v775 = vpack.c.bf16 %v733, %v732
      %v776 = vpack.c.bf16 %v735, %v734
      %v777 = vpack.c.bf16 %v737, %v736
      %v778 = vpack.c.bf16 %v739, %v738
      %v779 = vpack.c.bf16 %v741, %v740
      %v780 = vpack.c.bf16 %v743, %v742
      %v781 = vpack.c.bf16 %v745, %v744
      %v782 = vpack.c.bf16 %v747, %v746
      %v783 = vpack.c.bf16 %v749, %v748
      %v784 = vpack.c.bf16 %v751, %v750
      %v785 = vpack.c.bf16 %v753, %v752
      %v786 = vld [vmem:[%s3] sm:$0xf]
      %v787 = vld [vmem:[%s3 + $0x4] sm:$0xf]
      %v788 = vld [vmem:[%s3 + $0x8] sm:$0xf]
      %v789 = vld [vmem:[%s3 + $0xc] sm:$0xf]
      %v790 = vld [vmem:[%s3 + $0x10] sm:$0xf]
      %v791 = vld [vmem:[%s3 + $0x14] sm:$0xf]
      %v792 = vld [vmem:[%s3 + $0x18] sm:$0xf]
      %v793 = vld [vmem:[%s3 + $0x1c] sm:$0xf]
      %v794 = vld [vmem:[%s4] sm:$0x1]
      %v796 = vperm.slane %v794, 0
      %v806 = vunpack.c.l.b16 %v786
      %v807 = vunpack.c.l.b16 %v787
      %v808 = vunpack.c.l.b16 %v788
      %v809 = vunpack.c.l.b16 %v789
      %v810 = vunpack.c.l.b16 %v790
      %v811 = vunpack.c.l.b16 %v791
      %v812 = vunpack.c.l.b16 %v792
      %v813 = vunpack.c.l.b16 %v793
      %v814 = vpack.c.b16 %v807, %v806
      %v815 = vpack.c.b16 %v809, %v808
      %v816 = vpack.c.b16 %v811, %v810
      %v817 = vpack.c.b16 %v813, %v812
      %vm822 = vcmask 523264
      %v824 = vsel %vm822, %v754, 0
      %v827 = vsel %vm822, %v755, 0
      %v830 = vsel %vm822, %v756, 0
      %v833 = vsel %vm822, %v757, 0
      %v836 = vsel %vm822, %v758, 0
      %v839 = vsel %vm822, %v759, 0
      %v842 = vsel %vm822, %v760, 0
      %v845 = vsel %vm822, %v761, 0
      %v848 = vsel %vm822, %v762, 0
      %v851 = vsel %vm822, %v763, 0
      %v854 = vsel %vm822, %v764, 0
      %v857 = vsel %vm822, %v765, 0
      %v860 = vsel %vm822, %v766, 0
      %v863 = vsel %vm822, %v767, 0
      %v866 = vsel %vm822, %v768, 0
      %v869 = vsel %vm822, %v769, 0
      %v872 = vsel %vm822, %v770, 0
      %v875 = vsel %vm822, %v771, 0
      %v878 = vsel %vm822, %v772, 0
      %v881 = vsel %vm822, %v773, 0
      %v884 = vsel %vm822, %v774, 0
      %v887 = vsel %vm822, %v775, 0
      %v890 = vsel %vm822, %v776, 0
      %v893 = vsel %vm822, %v777, 0
      %v896 = vsel %vm822, %v778, 0
      %v899 = vsel %vm822, %v779, 0
      %v902 = vsel %vm822, %v780, 0
      %v905 = vsel %vm822, %v781, 0
      %v908 = vsel %vm822, %v782, 0
      %v911 = vsel %vm822, %v783, 0
      %v914 = vsel %vm822, %v784, 0
      %v917 = vsel %vm822, %v785, 0
      %919 = vmatpush.bf16.msra.mxu0 0
      %920 = vmatpush.bf16.msra.mxu0 0
      %921 = vmatpush.bf16.msra.mxu0 0
      %922 = vmatpush.bf16.msra.mxu0 0
      %923 = vmatpush.bf16.msra.mxu0 %v817
      %924 = vmatpush.bf16.msra.mxu0 %v816
      %925 = vmatpush.bf16.msra.mxu0 %v815
      %926 = vmatpush.bf16.msra.mxu0 %v814
      %927 = vmatmul.bf16.gmra.mxu0 %v824
      %v928 = vpop.f32.mrf.mxu0
      %v929 = vadd.f32 %v796, %v928
      %v930 = vpop.f32.mrf.mxu0
      %v931 = vadd.f32 %v796, %v930
      %932 = vmatmul.bf16.gmra.mxu0 %v827
      %v933 = vpop.f32.mrf.mxu0
      %v934 = vadd.f32 %v796, %v933
      %v935 = vpop.f32.mrf.mxu0
      %v936 = vadd.f32 %v796, %v935
      %937 = vmatmul.bf16.gmra.mxu0 %v830
      %v938 = vpop.f32.mrf.mxu0
      %v939 = vadd.f32 %v796, %v938
      %v940 = vpop.f32.mrf.mxu0
      %v941 = vadd.f32 %v796, %v940
      %942 = vmatmul.bf16.gmra.mxu0 %v833
      %v943 = vpop.f32.mrf.mxu0
      %v944 = vadd.f32 %v796, %v943
      %v945 = vpop.f32.mrf.mxu0
      %v946 = vadd.f32 %v796, %v945
      %947 = vmatmul.bf16.gmra.mxu0 %v836
      %v948 = vpop.f32.mrf.mxu0
      %v949 = vadd.f32 %v796, %v948
      %v950 = vpop.f32.mrf.mxu0
      %v951 = vadd.f32 %v796, %v950
      %952 = vmatmul.bf16.gmra.mxu0 %v839
      %v953 = vpop.f32.mrf.mxu0
      %v954 = vadd.f32 %v796, %v953
      %v955 = vpop.f32.mrf.mxu0
      %v956 = vadd.f32 %v796, %v955
      %957 = vmatmul.bf16.gmra.mxu0 %v842
      %v958 = vpop.f32.mrf.mxu0
      %v959 = vadd.f32 %v796, %v958
      %v960 = vpop.f32.mrf.mxu0
      %v961 = vadd.f32 %v796, %v960
      %962 = vmatmul.bf16.gmra.mxu0 %v845
      %v963 = vpop.f32.mrf.mxu0
      %v964 = vadd.f32 %v796, %v963
      %v965 = vpop.f32.mrf.mxu0
      %v966 = vadd.f32 %v796, %v965
      %967 = vmatmul.bf16.gmra.mxu0 %v848
      %v968 = vpop.f32.mrf.mxu0
      %v969 = vadd.f32 %v796, %v968
      %v970 = vpop.f32.mrf.mxu0
      %v971 = vadd.f32 %v796, %v970
      %972 = vmatmul.bf16.gmra.mxu0 %v851
      %v973 = vpop.f32.mrf.mxu0
      %v974 = vadd.f32 %v796, %v973
      %v975 = vpop.f32.mrf.mxu0
      %v976 = vadd.f32 %v796, %v975
      %977 = vmatmul.bf16.gmra.mxu0 %v854
      %v978 = vpop.f32.mrf.mxu0
      %v979 = vadd.f32 %v796, %v978
      %v980 = vpop.f32.mrf.mxu0
      %v981 = vadd.f32 %v796, %v980
      %982 = vmatmul.bf16.gmra.mxu0 %v857
      %v983 = vpop.f32.mrf.mxu0
      %v984 = vadd.f32 %v796, %v983
      %v985 = vpop.f32.mrf.mxu0
      %v986 = vadd.f32 %v796, %v985
      %987 = vmatmul.bf16.gmra.mxu0 %v860
      %v988 = vpop.f32.mrf.mxu0
      %v989 = vadd.f32 %v796, %v988
      %v990 = vpop.f32.mrf.mxu0
      %v991 = vadd.f32 %v796, %v990
      %992 = vmatmul.bf16.gmra.mxu0 %v863
      %v993 = vpop.f32.mrf.mxu0
      %v994 = vadd.f32 %v796, %v993
      %v995 = vpop.f32.mrf.mxu0
      %v996 = vadd.f32 %v796, %v995
      %997 = vmatmul.bf16.gmra.mxu0 %v866
      %v998 = vpop.f32.mrf.mxu0
      %v999 = vadd.f32 %v796, %v998
      %v1000 = vpop.f32.mrf.mxu0
      %v1001 = vadd.f32 %v796, %v1000
      %1002 = vmatmul.bf16.gmra.mxu0 %v869
      %v1003 = vpop.f32.mrf.mxu0
      %v1004 = vadd.f32 %v796, %v1003
      %v1005 = vpop.f32.mrf.mxu0
      %v1006 = vadd.f32 %v796, %v1005
      %1007 = vmatmul.bf16.gmra.mxu0 %v872
      %v1008 = vpop.f32.mrf.mxu0
      %v1009 = vadd.f32 %v796, %v1008
      %v1010 = vpop.f32.mrf.mxu0
      %v1011 = vadd.f32 %v796, %v1010
      %1012 = vmatmul.bf16.gmra.mxu0 %v875
      %v1013 = vpop.f32.mrf.mxu0
      %v1014 = vadd.f32 %v796, %v1013
      %v1015 = vpop.f32.mrf.mxu0
      %v1016 = vadd.f32 %v796, %v1015
      %1017 = vmatmul.bf16.gmra.mxu0 %v878
      %v1018 = vpop.f32.mrf.mxu0
      %v1019 = vadd.f32 %v796, %v1018
      %v1020 = vpop.f32.mrf.mxu0
      %v1021 = vadd.f32 %v796, %v1020
      %1022 = vmatmul.bf16.gmra.mxu0 %v881
      %v1023 = vpop.f32.mrf.mxu0
      %v1024 = vadd.f32 %v796, %v1023
      %v1025 = vpop.f32.mrf.mxu0
      %v1026 = vadd.f32 %v796, %v1025
      %1027 = vmatmul.bf16.gmra.mxu0 %v884
      %v1028 = vpop.f32.mrf.mxu0
      %v1029 = vadd.f32 %v796, %v1028
      %v1030 = vpop.f32.mrf.mxu0
      %v1031 = vadd.f32 %v796, %v1030
      %1032 = vmatmul.bf16.gmra.mxu0 %v887
      %v1033 = vpop.f32.mrf.mxu0
      %v1034 = vadd.f32 %v796, %v1033
      %v1035 = vpop.f32.mrf.mxu0
      %v1036 = vadd.f32 %v796, %v1035
      %1037 = vmatmul.bf16.gmra.mxu0 %v890
      %v1038 = vpop.f32.mrf.mxu0
      %v1039 = vadd.f32 %v796, %v1038
      %v1040 = vpop.f32.mrf.mxu0
      %v1041 = vadd.f32 %v796, %v1040
      %1042 = vmatmul.bf16.gmra.mxu0 %v893
      %v1043 = vpop.f32.mrf.mxu0
      %v1044 = vadd.f32 %v796, %v1043
      %v1045 = vpop.f32.mrf.mxu0
      %v1046 = vadd.f32 %v796, %v1045
      %1047 = vmatmul.bf16.gmra.mxu0 %v896
      %v1048 = vpop.f32.mrf.mxu0
      %v1049 = vadd.f32 %v796, %v1048
      %v1050 = vpop.f32.mrf.mxu0
      %v1051 = vadd.f32 %v796, %v1050
      %1052 = vmatmul.bf16.gmra.mxu0 %v899
      %v1053 = vpop.f32.mrf.mxu0
      %v1054 = vadd.f32 %v796, %v1053
      %v1055 = vpop.f32.mrf.mxu0
      %v1056 = vadd.f32 %v796, %v1055
      %1057 = vmatmul.bf16.gmra.mxu0 %v902
      %v1058 = vpop.f32.mrf.mxu0
      %v1059 = vadd.f32 %v796, %v1058
      %v1060 = vpop.f32.mrf.mxu0
      %v1061 = vadd.f32 %v796, %v1060
      %1062 = vmatmul.bf16.gmra.mxu0 %v905
      %v1063 = vpop.f32.mrf.mxu0
      %v1064 = vadd.f32 %v796, %v1063
      %v1065 = vpop.f32.mrf.mxu0
      %v1066 = vadd.f32 %v796, %v1065
      %1067 = vmatmul.bf16.gmra.mxu0 %v908
      %v1068 = vpop.f32.mrf.mxu0
      %v1069 = vadd.f32 %v796, %v1068
      %v1070 = vpop.f32.mrf.mxu0
      %v1071 = vadd.f32 %v796, %v1070
      %1072 = vmatmul.bf16.gmra.mxu0 %v911
      %v1073 = vpop.f32.mrf.mxu0
      %v1074 = vadd.f32 %v796, %v1073
      %v1075 = vpop.f32.mrf.mxu0
      %v1076 = vadd.f32 %v796, %v1075
      %1077 = vmatmul.bf16.gmra.mxu0 %v914
      %v1078 = vpop.f32.mrf.mxu0
      %v1079 = vadd.f32 %v796, %v1078
      %v1080 = vpop.f32.mrf.mxu0
      %v1081 = vadd.f32 %v796, %v1080
      %1082 = vmatmul.bf16.gmra.mxu0 %v917
      %v1083 = vpop.f32.mrf.mxu0
      %v1084 = vadd.f32 %v796, %v1083
      %v1085 = vpop.f32.mrf.mxu0
      %v1086 = vadd.f32 %v796, %v1085
      %1087 = vdwg.mxu0
      %v1088 = vmax.f32 %v929, 0.0
      %v1089 = vmax.f32 %v931, 0.0
      %v1090 = vmax.f32 %v934, 0.0
      %v1091 = vmax.f32 %v936, 0.0
      %v1092 = vmax.f32 %v939, 0.0
      %v1093 = vmax.f32 %v941, 0.0
      %v1094 = vmax.f32 %v944, 0.0
      %v1095 = vmax.f32 %v946, 0.0
      %v1096 = vmax.f32 %v949, 0.0
      %v1097 = vmax.f32 %v951, 0.0
      %v1098 = vmax.f32 %v954, 0.0
      %v1099 = vmax.f32 %v956, 0.0
      %v1100 = vmax.f32 %v959, 0.0
      %v1101 = vmax.f32 %v961, 0.0
      %v1102 = vmax.f32 %v964, 0.0
      %v1103 = vmax.f32 %v966, 0.0
      %v1104 = vmax.f32 %v969, 0.0
      %v1105 = vmax.f32 %v971, 0.0
      %v1106 = vmax.f32 %v974, 0.0
      %v1107 = vmax.f32 %v976, 0.0
      %v1108 = vmax.f32 %v979, 0.0
      %v1109 = vmax.f32 %v981, 0.0
      %v1110 = vmax.f32 %v984, 0.0
      %v1111 = vmax.f32 %v986, 0.0
      %v1112 = vmax.f32 %v989, 0.0
      %v1113 = vmax.f32 %v991, 0.0
      %v1114 = vmax.f32 %v994, 0.0
      %v1115 = vmax.f32 %v996, 0.0
      %v1116 = vmax.f32 %v999, 0.0
      %v1117 = vmax.f32 %v1001, 0.0
      %v1118 = vmax.f32 %v1004, 0.0
      %v1119 = vmax.f32 %v1006, 0.0
      %v1120 = vmax.f32 %v1009, 0.0
      %v1121 = vmax.f32 %v1011, 0.0
      %v1122 = vmax.f32 %v1014, 0.0
      %v1123 = vmax.f32 %v1016, 0.0
      %v1124 = vmax.f32 %v1019, 0.0
      %v1125 = vmax.f32 %v1021, 0.0
      %v1126 = vmax.f32 %v1024, 0.0
      %v1127 = vmax.f32 %v1026, 0.0
      %v1128 = vmax.f32 %v1029, 0.0
      %v1129 = vmax.f32 %v1031, 0.0
      %v1130 = vmax.f32 %v1034, 0.0
      %v1131 = vmax.f32 %v1036, 0.0
      %v1132 = vmax.f32 %v1039, 0.0
      %v1133 = vmax.f32 %v1041, 0.0
      %v1134 = vmax.f32 %v1044, 0.0
      %v1135 = vmax.f32 %v1046, 0.0
      %v1136 = vmax.f32 %v1049, 0.0
      %v1137 = vmax.f32 %v1051, 0.0
      %v1138 = vmax.f32 %v1054, 0.0
      %v1139 = vmax.f32 %v1056, 0.0
      %v1140 = vmax.f32 %v1059, 0.0
      %v1141 = vmax.f32 %v1061, 0.0
      %v1142 = vmax.f32 %v1064, 0.0
      %v1143 = vmax.f32 %v1066, 0.0
      %v1144 = vmax.f32 %v1069, 0.0
      %v1145 = vmax.f32 %v1071, 0.0
      %v1146 = vmax.f32 %v1074, 0.0
      %v1147 = vmax.f32 %v1076, 0.0
      %v1148 = vmax.f32 %v1079, 0.0
      %v1149 = vmax.f32 %v1081, 0.0
      %v1150 = vmax.f32 %v1084, 0.0
      %v1151 = vmax.f32 %v1086, 0.0
      %v1152 = vpack.c.bf16 %v1089, %v1088
      %v1153 = vpack.c.bf16 %v1091, %v1090
      %v1154 = vpack.c.bf16 %v1093, %v1092
      %v1155 = vpack.c.bf16 %v1095, %v1094
      %v1156 = vpack.c.bf16 %v1097, %v1096
      %v1157 = vpack.c.bf16 %v1099, %v1098
      %v1158 = vpack.c.bf16 %v1101, %v1100
      %v1159 = vpack.c.bf16 %v1103, %v1102
      %v1160 = vpack.c.bf16 %v1105, %v1104
      %v1161 = vpack.c.bf16 %v1107, %v1106
      %v1162 = vpack.c.bf16 %v1109, %v1108
      %v1163 = vpack.c.bf16 %v1111, %v1110
      %v1164 = vpack.c.bf16 %v1113, %v1112
      %v1165 = vpack.c.bf16 %v1115, %v1114
      %v1166 = vpack.c.bf16 %v1117, %v1116
      %v1167 = vpack.c.bf16 %v1119, %v1118
      %v1168 = vpack.c.bf16 %v1121, %v1120
      %v1169 = vpack.c.bf16 %v1123, %v1122
      %v1170 = vpack.c.bf16 %v1125, %v1124
      %v1171 = vpack.c.bf16 %v1127, %v1126
      %v1172 = vpack.c.bf16 %v1129, %v1128
      %v1173 = vpack.c.bf16 %v1131, %v1130
      %v1174 = vpack.c.bf16 %v1133, %v1132
      %v1175 = vpack.c.bf16 %v1135, %v1134
      %v1176 = vpack.c.bf16 %v1137, %v1136
      %v1177 = vpack.c.bf16 %v1139, %v1138
      %v1178 = vpack.c.bf16 %v1141, %v1140
      %v1179 = vpack.c.bf16 %v1143, %v1142
      %v1180 = vpack.c.bf16 %v1145, %v1144
      %v1181 = vpack.c.bf16 %v1147, %v1146
      %v1182 = vpack.c.bf16 %v1149, %v1148
      %v1183 = vpack.c.bf16 %v1151, %v1150
      %v1184 = vld [vmem:[%s5] sm:$0xf]
      %v1185 = vld [vmem:[%s5 + $0x4] sm:$0xf]
      %v1186 = vld [vmem:[%s5 + $0x8] sm:$0xf]
      %v1187 = vld [vmem:[%s5 + $0xc] sm:$0xf]
      %v1188 = vld [vmem:[%s6] sm:$0x1]
      %v1190 = vperm.slane %v1188, 0
      %v1196 = vunpack.c.l.b16 %v1184
      %v1197 = vunpack.c.l.b16 %v1185
      %v1198 = vunpack.c.l.b16 %v1186
      %v1199 = vunpack.c.l.b16 %v1187
      %v1200 = vpack.c.b16 %v1197, %v1196
      %v1201 = vpack.c.b16 %v1199, %v1198
      %vm1204 = vcmask 261120
      %v1206 = vsel %vm1204, %v1152, 0
      %v1209 = vsel %vm1204, %v1153, 0
      %v1212 = vsel %vm1204, %v1154, 0
      %v1215 = vsel %vm1204, %v1155, 0
      %v1218 = vsel %vm1204, %v1156, 0
      %v1221 = vsel %vm1204, %v1157, 0
      %v1224 = vsel %vm1204, %v1158, 0
      %v1227 = vsel %vm1204, %v1159, 0
      %v1230 = vsel %vm1204, %v1160, 0
      %v1233 = vsel %vm1204, %v1161, 0
      %v1236 = vsel %vm1204, %v1162, 0
      %v1239 = vsel %vm1204, %v1163, 0
      %v1242 = vsel %vm1204, %v1164, 0
      %v1245 = vsel %vm1204, %v1165, 0
      %v1248 = vsel %vm1204, %v1166, 0
      %v1251 = vsel %vm1204, %v1167, 0
      %v1254 = vsel %vm1204, %v1168, 0
      %v1257 = vsel %vm1204, %v1169, 0
      %v1260 = vsel %vm1204, %v1170, 0
      %v1263 = vsel %vm1204, %v1171, 0
      %v1266 = vsel %vm1204, %v1172, 0
      %v1269 = vsel %vm1204, %v1173, 0
      %v1272 = vsel %vm1204, %v1174, 0
      %v1275 = vsel %vm1204, %v1175, 0
      %v1278 = vsel %vm1204, %v1176, 0
      %v1281 = vsel %vm1204, %v1177, 0
      %v1284 = vsel %vm1204, %v1178, 0
      %v1287 = vsel %vm1204, %v1179, 0
      %v1290 = vsel %vm1204, %v1180, 0
      %v1293 = vsel %vm1204, %v1181, 0
      %v1296 = vsel %vm1204, %v1182, 0
      %v1299 = vsel %vm1204, %v1183, 0
      %1301 = vmatpush.bf16.msra.mxu0 0
      %1302 = vmatpush.bf16.msra.mxu0 0
      %1303 = vmatpush.bf16.msra.mxu0 0
      %1304 = vmatpush.bf16.msra.mxu0 0
      %1305 = vmatpush.bf16.msra.mxu0 0
      %1306 = vmatpush.bf16.msra.mxu0 0
      %1307 = vmatpush.bf16.msra.mxu0 %v1201
      %1308 = vmatpush.bf16.msra.mxu0 %v1200
      %1309 = vmatmul.bf16.gmra.mxu0 %v1206
      %v1310 = vpop.f32.mrf.mxu0
      %v1311 = vadd.f32 %v1190, %v1310
      %v1312 = vpop.f32.mrf.mxu0
      %v1313 = vadd.f32 %v1190, %v1312
      %1314 = vmatmul.bf16.gmra.mxu0 %v1209
      %v1315 = vpop.f32.mrf.mxu0
      %v1316 = vadd.f32 %v1190, %v1315
      %v1317 = vpop.f32.mrf.mxu0
      %v1318 = vadd.f32 %v1190, %v1317
      %1319 = vmatmul.bf16.gmra.mxu0 %v1212
      %v1320 = vpop.f32.mrf.mxu0
      %v1321 = vadd.f32 %v1190, %v1320
      %v1322 = vpop.f32.mrf.mxu0
      %v1323 = vadd.f32 %v1190, %v1322
      %1324 = vmatmul.bf16.gmra.mxu0 %v1215
      %v1325 = vpop.f32.mrf.mxu0
      %v1326 = vadd.f32 %v1190, %v1325
      %v1327 = vpop.f32.mrf.mxu0
      %v1328 = vadd.f32 %v1190, %v1327
      %1329 = vmatmul.bf16.gmra.mxu0 %v1218
      %v1330 = vpop.f32.mrf.mxu0
      %v1331 = vadd.f32 %v1190, %v1330
      %v1332 = vpop.f32.mrf.mxu0
      %v1333 = vadd.f32 %v1190, %v1332
      %1334 = vmatmul.bf16.gmra.mxu0 %v1221
      %v1335 = vpop.f32.mrf.mxu0
      %v1336 = vadd.f32 %v1190, %v1335
      %v1337 = vpop.f32.mrf.mxu0
      %v1338 = vadd.f32 %v1190, %v1337
      %1339 = vmatmul.bf16.gmra.mxu0 %v1224
      %v1340 = vpop.f32.mrf.mxu0
      %v1341 = vadd.f32 %v1190, %v1340
      %v1342 = vpop.f32.mrf.mxu0
      %v1343 = vadd.f32 %v1190, %v1342
      %1344 = vmatmul.bf16.gmra.mxu0 %v1227
      %v1345 = vpop.f32.mrf.mxu0
      %v1346 = vadd.f32 %v1190, %v1345
      %v1347 = vpop.f32.mrf.mxu0
      %v1348 = vadd.f32 %v1190, %v1347
      %1349 = vmatmul.bf16.gmra.mxu0 %v1230
      %v1350 = vpop.f32.mrf.mxu0
      %v1351 = vadd.f32 %v1190, %v1350
      %v1352 = vpop.f32.mrf.mxu0
      %v1353 = vadd.f32 %v1190, %v1352
      %1354 = vmatmul.bf16.gmra.mxu0 %v1233
      %v1355 = vpop.f32.mrf.mxu0
      %v1356 = vadd.f32 %v1190, %v1355
      %v1357 = vpop.f32.mrf.mxu0
      %v1358 = vadd.f32 %v1190, %v1357
      %1359 = vmatmul.bf16.gmra.mxu0 %v1236
      %v1360 = vpop.f32.mrf.mxu0
      %v1361 = vadd.f32 %v1190, %v1360
      %v1362 = vpop.f32.mrf.mxu0
      %v1363 = vadd.f32 %v1190, %v1362
      %1364 = vmatmul.bf16.gmra.mxu0 %v1239
      %v1365 = vpop.f32.mrf.mxu0
      %v1366 = vadd.f32 %v1190, %v1365
      %v1367 = vpop.f32.mrf.mxu0
      %v1368 = vadd.f32 %v1190, %v1367
      %1369 = vmatmul.bf16.gmra.mxu0 %v1242
      %v1370 = vpop.f32.mrf.mxu0
      %v1371 = vadd.f32 %v1190, %v1370
      %v1372 = vpop.f32.mrf.mxu0
      %v1373 = vadd.f32 %v1190, %v1372
      %1374 = vmatmul.bf16.gmra.mxu0 %v1245
      %v1375 = vpop.f32.mrf.mxu0
      %v1376 = vadd.f32 %v1190, %v1375
      %v1377 = vpop.f32.mrf.mxu0
      %v1378 = vadd.f32 %v1190, %v1377
      %1379 = vmatmul.bf16.gmra.mxu0 %v1248
      %v1380 = vpop.f32.mrf.mxu0
      %v1381 = vadd.f32 %v1190, %v1380
      %v1382 = vpop.f32.mrf.mxu0
      %v1383 = vadd.f32 %v1190, %v1382
      %1384 = vmatmul.bf16.gmra.mxu0 %v1251
      %v1385 = vpop.f32.mrf.mxu0
      %v1386 = vadd.f32 %v1190, %v1385
      %v1387 = vpop.f32.mrf.mxu0
      %v1388 = vadd.f32 %v1190, %v1387
      %1389 = vmatmul.bf16.gmra.mxu0 %v1254
      %v1390 = vpop.f32.mrf.mxu0
      %v1391 = vadd.f32 %v1190, %v1390
      %v1392 = vpop.f32.mrf.mxu0
      %v1393 = vadd.f32 %v1190, %v1392
      %1394 = vmatmul.bf16.gmra.mxu0 %v1257
      %v1395 = vpop.f32.mrf.mxu0
      %v1396 = vadd.f32 %v1190, %v1395
      %v1397 = vpop.f32.mrf.mxu0
      %v1398 = vadd.f32 %v1190, %v1397
      %1399 = vmatmul.bf16.gmra.mxu0 %v1260
      %v1400 = vpop.f32.mrf.mxu0
      %v1401 = vadd.f32 %v1190, %v1400
      %v1402 = vpop.f32.mrf.mxu0
      %v1403 = vadd.f32 %v1190, %v1402
      %1404 = vmatmul.bf16.gmra.mxu0 %v1263
      %v1405 = vpop.f32.mrf.mxu0
      %v1406 = vadd.f32 %v1190, %v1405
      %v1407 = vpop.f32.mrf.mxu0
      %v1408 = vadd.f32 %v1190, %v1407
      %1409 = vmatmul.bf16.gmra.mxu0 %v1266
      %v1410 = vpop.f32.mrf.mxu0
      %v1411 = vadd.f32 %v1190, %v1410
      %v1412 = vpop.f32.mrf.mxu0
      %v1413 = vadd.f32 %v1190, %v1412
      %1414 = vmatmul.bf16.gmra.mxu0 %v1269
      %v1415 = vpop.f32.mrf.mxu0
      %v1416 = vadd.f32 %v1190, %v1415
      %v1417 = vpop.f32.mrf.mxu0
      %v1418 = vadd.f32 %v1190, %v1417
      %1419 = vmatmul.bf16.gmra.mxu0 %v1272
      %v1420 = vpop.f32.mrf.mxu0
      %v1421 = vadd.f32 %v1190, %v1420
      %v1422 = vpop.f32.mrf.mxu0
      %v1423 = vadd.f32 %v1190, %v1422
      %1424 = vmatmul.bf16.gmra.mxu0 %v1275
      %v1425 = vpop.f32.mrf.mxu0
      %v1426 = vadd.f32 %v1190, %v1425
      %v1427 = vpop.f32.mrf.mxu0
      %v1428 = vadd.f32 %v1190, %v1427
      %1429 = vmatmul.bf16.gmra.mxu0 %v1278
      %v1430 = vpop.f32.mrf.mxu0
      %v1431 = vadd.f32 %v1190, %v1430
      %v1432 = vpop.f32.mrf.mxu0
      %v1433 = vadd.f32 %v1190, %v1432
      %1434 = vmatmul.bf16.gmra.mxu0 %v1281
      %v1435 = vpop.f32.mrf.mxu0
      %v1436 = vadd.f32 %v1190, %v1435
      %v1437 = vpop.f32.mrf.mxu0
      %v1438 = vadd.f32 %v1190, %v1437
      %1439 = vmatmul.bf16.gmra.mxu0 %v1284
      %v1440 = vpop.f32.mrf.mxu0
      %v1441 = vadd.f32 %v1190, %v1440
      %v1442 = vpop.f32.mrf.mxu0
      %v1443 = vadd.f32 %v1190, %v1442
      %1444 = vmatmul.bf16.gmra.mxu0 %v1287
      %v1445 = vpop.f32.mrf.mxu0
      %v1446 = vadd.f32 %v1190, %v1445
      %v1447 = vpop.f32.mrf.mxu0
      %v1448 = vadd.f32 %v1190, %v1447
      %1449 = vmatmul.bf16.gmra.mxu0 %v1290
      %v1450 = vpop.f32.mrf.mxu0
      %v1451 = vadd.f32 %v1190, %v1450
      %v1452 = vpop.f32.mrf.mxu0
      %v1453 = vadd.f32 %v1190, %v1452
      %1454 = vmatmul.bf16.gmra.mxu0 %v1293
      %v1455 = vpop.f32.mrf.mxu0
      %v1456 = vadd.f32 %v1190, %v1455
      %v1457 = vpop.f32.mrf.mxu0
      %v1458 = vadd.f32 %v1190, %v1457
      %1459 = vmatmul.bf16.gmra.mxu0 %v1296
      %v1460 = vpop.f32.mrf.mxu0
      %v1461 = vadd.f32 %v1190, %v1460
      %v1462 = vpop.f32.mrf.mxu0
      %v1463 = vadd.f32 %v1190, %v1462
      %1464 = vmatmul.bf16.gmra.mxu0 %v1299
      %v1465 = vpop.f32.mrf.mxu0
      %v1466 = vadd.f32 %v1190, %v1465
      %v1467 = vpop.f32.mrf.mxu0
      %v1468 = vadd.f32 %v1190, %v1467
      %1469 = vdwg.mxu0
      %v1470 = vpack.c.bf16 %v533, %v531
      %v1471 = vpack.c.bf16 %v538, %v536
      %v1472 = vpack.c.bf16 %v543, %v541
      %v1473 = vpack.c.bf16 %v548, %v546
      %v1474 = vpack.c.bf16 %v553, %v551
      %v1475 = vpack.c.bf16 %v558, %v556
      %v1476 = vpack.c.bf16 %v563, %v561
      %v1477 = vpack.c.bf16 %v568, %v566
      %v1478 = vpack.c.bf16 %v573, %v571
      %v1479 = vpack.c.bf16 %v578, %v576
      %v1480 = vpack.c.bf16 %v583, %v581
      %v1481 = vpack.c.bf16 %v588, %v586
      %v1482 = vpack.c.bf16 %v593, %v591
      %v1483 = vpack.c.bf16 %v598, %v596
      %v1484 = vpack.c.bf16 %v603, %v601
      %v1485 = vpack.c.bf16 %v608, %v606
      %v1486 = vpack.c.bf16 %v613, %v611
      %v1487 = vpack.c.bf16 %v618, %v616
      %v1488 = vpack.c.bf16 %v623, %v621
      %v1489 = vpack.c.bf16 %v628, %v626
      %v1490 = vpack.c.bf16 %v633, %v631
      %v1491 = vpack.c.bf16 %v638, %v636
      %v1492 = vpack.c.bf16 %v643, %v641
      %v1493 = vpack.c.bf16 %v648, %v646
      %v1494 = vpack.c.bf16 %v653, %v651
      %v1495 = vpack.c.bf16 %v658, %v656
      %v1496 = vpack.c.bf16 %v663, %v661
      %v1497 = vpack.c.bf16 %v668, %v666
      %v1498 = vpack.c.bf16 %v673, %v671
      %v1499 = vpack.c.bf16 %v678, %v676
      %v1500 = vpack.c.bf16 %v683, %v681
      %v1501 = vpack.c.bf16 %v688, %v686
      %v1502 = vld [vmem:[%s7] sm:$0xf]
      %v1503 = vld [vmem:[%s7 + $0x4] sm:$0xf]
      %v1504 = vld [vmem:[%s7 + $0x8] sm:$0xf]
      %v1505 = vld [vmem:[%s7 + $0xc] sm:$0xf]
      %v1506 = vld [vmem:[%s7 + $0x10] sm:$0xf]
      %v1507 = vld [vmem:[%s7 + $0x14] sm:$0xf]
      %v1508 = vld [vmem:[%s7 + $0x18] sm:$0xf]
      %v1509 = vld [vmem:[%s7 + $0x1c] sm:$0xf]
      %v1518 = vunpack.c.l.b16 %v1502
      %v1519 = vunpack.c.l.b16 %v1503
      %v1520 = vunpack.c.l.b16 %v1504
      %v1521 = vunpack.c.l.b16 %v1505
      %v1522 = vunpack.c.l.b16 %v1506
      %v1523 = vunpack.c.l.b16 %v1507
      %v1524 = vunpack.c.l.b16 %v1508
      %v1525 = vunpack.c.l.b16 %v1509
      %v1526 = vpack.c.b16 %v1519, %v1518
      %v1527 = vpack.c.b16 %v1521, %v1520
      %v1528 = vpack.c.b16 %v1523, %v1522
      %v1529 = vpack.c.b16 %v1525, %v1524
      %v1535 = vsel %vm822, %v1470, 0
      %v1538 = vsel %vm822, %v1471, 0
      %v1541 = vsel %vm822, %v1472, 0
      %v1544 = vsel %vm822, %v1473, 0
      %v1547 = vsel %vm822, %v1474, 0
      %v1550 = vsel %vm822, %v1475, 0
      %v1553 = vsel %vm822, %v1476, 0
      %v1556 = vsel %vm822, %v1477, 0
      %v1559 = vsel %vm822, %v1478, 0
      %v1562 = vsel %vm822, %v1479, 0
      %v1565 = vsel %vm822, %v1480, 0
      %v1568 = vsel %vm822, %v1481, 0
      %v1571 = vsel %vm822, %v1482, 0
      %v1574 = vsel %vm822, %v1483, 0
      %v1577 = vsel %vm822, %v1484, 0
      %v1580 = vsel %vm822, %v1485, 0
      %v1583 = vsel %vm822, %v1486, 0
      %v1586 = vsel %vm822, %v1487, 0
      %v1589 = vsel %vm822, %v1488, 0
      %v1592 = vsel %vm822, %v1489, 0
      %v1595 = vsel %vm822, %v1490, 0
      %v1598 = vsel %vm822, %v1491, 0
      %v1601 = vsel %vm822, %v1492, 0
      %v1604 = vsel %vm822, %v1493, 0
      %v1607 = vsel %vm822, %v1494, 0
      %v1610 = vsel %vm822, %v1495, 0
      %v1613 = vsel %vm822, %v1496, 0
      %v1616 = vsel %vm822, %v1497, 0
      %v1619 = vsel %vm822, %v1498, 0
      %v1622 = vsel %vm822, %v1499, 0
      %v1625 = vsel %vm822, %v1500, 0
      %v1628 = vsel %vm822, %v1501, 0
      %1630 = vmatpush.bf16.msra.mxu0 0
      %1631 = vmatpush.bf16.msra.mxu0 0
      %1632 = vmatpush.bf16.msra.mxu0 0
      %1633 = vmatpush.bf16.msra.mxu0 0
      %1634 = vmatpush.bf16.msra.mxu0 %v1529
      %1635 = vmatpush.bf16.msra.mxu0 %v1528
      %1636 = vmatpush.bf16.msra.mxu0 %v1527
      %1637 = vmatpush.bf16.msra.mxu0 %v1526
      %1638 = vmatmul.bf16.gmra.mxu0 %v1535
      %v1639 = vpop.f32.mrf.mxu0
      %v1640 = vadd.f32 %v1311, %v1639
      %v1641 = vpop.f32.mrf.mxu0
      %v1642 = vadd.f32 %v1313, %v1641
      %1643 = vmatmul.bf16.gmra.mxu0 %v1538
      %v1644 = vpop.f32.mrf.mxu0
      %v1645 = vadd.f32 %v1316, %v1644
      %v1646 = vpop.f32.mrf.mxu0
      %v1647 = vadd.f32 %v1318, %v1646
      %1648 = vmatmul.bf16.gmra.mxu0 %v1541
      %v1649 = vpop.f32.mrf.mxu0
      %v1650 = vadd.f32 %v1321, %v1649
      %v1651 = vpop.f32.mrf.mxu0
      %v1652 = vadd.f32 %v1323, %v1651
      %1653 = vmatmul.bf16.gmra.mxu0 %v1544
      %v1654 = vpop.f32.mrf.mxu0
      %v1655 = vadd.f32 %v1326, %v1654
      %v1656 = vpop.f32.mrf.mxu0
      %v1657 = vadd.f32 %v1328, %v1656
      %1658 = vmatmul.bf16.gmra.mxu0 %v1547
      %v1659 = vpop.f32.mrf.mxu0
      %v1660 = vadd.f32 %v1331, %v1659
      %v1661 = vpop.f32.mrf.mxu0
      %v1662 = vadd.f32 %v1333, %v1661
      %1663 = vmatmul.bf16.gmra.mxu0 %v1550
      %v1664 = vpop.f32.mrf.mxu0
      %v1665 = vadd.f32 %v1336, %v1664
      %v1666 = vpop.f32.mrf.mxu0
      %v1667 = vadd.f32 %v1338, %v1666
      %1668 = vmatmul.bf16.gmra.mxu0 %v1553
      %v1669 = vpop.f32.mrf.mxu0
      %v1670 = vadd.f32 %v1341, %v1669
      %v1671 = vpop.f32.mrf.mxu0
      %v1672 = vadd.f32 %v1343, %v1671
      %1673 = vmatmul.bf16.gmra.mxu0 %v1556
      %v1674 = vpop.f32.mrf.mxu0
      %v1675 = vadd.f32 %v1346, %v1674
      %v1676 = vpop.f32.mrf.mxu0
      %v1677 = vadd.f32 %v1348, %v1676
      %1678 = vmatmul.bf16.gmra.mxu0 %v1559
      %v1679 = vpop.f32.mrf.mxu0
      %v1680 = vadd.f32 %v1351, %v1679
      %v1681 = vpop.f32.mrf.mxu0
      %v1682 = vadd.f32 %v1353, %v1681
      %1683 = vmatmul.bf16.gmra.mxu0 %v1562
      %v1684 = vpop.f32.mrf.mxu0
      %v1685 = vadd.f32 %v1356, %v1684
      %v1686 = vpop.f32.mrf.mxu0
      %v1687 = vadd.f32 %v1358, %v1686
      %1688 = vmatmul.bf16.gmra.mxu0 %v1565
      %v1689 = vpop.f32.mrf.mxu0
      %v1690 = vadd.f32 %v1361, %v1689
      %v1691 = vpop.f32.mrf.mxu0
      %v1692 = vadd.f32 %v1363, %v1691
      %1693 = vmatmul.bf16.gmra.mxu0 %v1568
      %v1694 = vpop.f32.mrf.mxu0
      %v1695 = vadd.f32 %v1366, %v1694
      %v1696 = vpop.f32.mrf.mxu0
      %v1697 = vadd.f32 %v1368, %v1696
      %1698 = vmatmul.bf16.gmra.mxu0 %v1571
      %v1699 = vpop.f32.mrf.mxu0
      %v1700 = vadd.f32 %v1371, %v1699
      %v1701 = vpop.f32.mrf.mxu0
      %v1702 = vadd.f32 %v1373, %v1701
      %1703 = vmatmul.bf16.gmra.mxu0 %v1574
      %v1704 = vpop.f32.mrf.mxu0
      %v1705 = vadd.f32 %v1376, %v1704
      %v1706 = vpop.f32.mrf.mxu0
      %v1707 = vadd.f32 %v1378, %v1706
      %1708 = vmatmul.bf16.gmra.mxu0 %v1577
      %v1709 = vpop.f32.mrf.mxu0
      %v1710 = vadd.f32 %v1381, %v1709
      %v1711 = vpop.f32.mrf.mxu0
      %v1712 = vadd.f32 %v1383, %v1711
      %1713 = vmatmul.bf16.gmra.mxu0 %v1580
      %v1714 = vpop.f32.mrf.mxu0
      %v1715 = vadd.f32 %v1386, %v1714
      %v1716 = vpop.f32.mrf.mxu0
      %v1717 = vadd.f32 %v1388, %v1716
      %1718 = vmatmul.bf16.gmra.mxu0 %v1583
      %v1719 = vpop.f32.mrf.mxu0
      %v1720 = vadd.f32 %v1391, %v1719
      %v1721 = vpop.f32.mrf.mxu0
      %v1722 = vadd.f32 %v1393, %v1721
      %1723 = vmatmul.bf16.gmra.mxu0 %v1586
      %v1724 = vpop.f32.mrf.mxu0
      %v1725 = vadd.f32 %v1396, %v1724
      %v1726 = vpop.f32.mrf.mxu0
      %v1727 = vadd.f32 %v1398, %v1726
      %1728 = vmatmul.bf16.gmra.mxu0 %v1589
      %v1729 = vpop.f32.mrf.mxu0
      %v1730 = vadd.f32 %v1401, %v1729
      %v1731 = vpop.f32.mrf.mxu0
      %v1732 = vadd.f32 %v1403, %v1731
      %1733 = vmatmul.bf16.gmra.mxu0 %v1592
      %v1734 = vpop.f32.mrf.mxu0
      %v1735 = vadd.f32 %v1406, %v1734
      %v1736 = vpop.f32.mrf.mxu0
      %v1737 = vadd.f32 %v1408, %v1736
      %1738 = vmatmul.bf16.gmra.mxu0 %v1595
      %v1739 = vpop.f32.mrf.mxu0
      %v1740 = vadd.f32 %v1411, %v1739
      %v1741 = vpop.f32.mrf.mxu0
      %v1742 = vadd.f32 %v1413, %v1741
      %1743 = vmatmul.bf16.gmra.mxu0 %v1598
      %v1744 = vpop.f32.mrf.mxu0
      %v1745 = vadd.f32 %v1416, %v1744
      %v1746 = vpop.f32.mrf.mxu0
      %v1747 = vadd.f32 %v1418, %v1746
      %1748 = vmatmul.bf16.gmra.mxu0 %v1601
      %v1749 = vpop.f32.mrf.mxu0
      %v1750 = vadd.f32 %v1421, %v1749
      %v1751 = vpop.f32.mrf.mxu0
      %v1752 = vadd.f32 %v1423, %v1751
      %1753 = vmatmul.bf16.gmra.mxu0 %v1604
      %v1754 = vpop.f32.mrf.mxu0
      %v1755 = vadd.f32 %v1426, %v1754
      %v1756 = vpop.f32.mrf.mxu0
      %v1757 = vadd.f32 %v1428, %v1756
      %1758 = vmatmul.bf16.gmra.mxu0 %v1607
      %v1759 = vpop.f32.mrf.mxu0
      %v1760 = vadd.f32 %v1431, %v1759
      %v1761 = vpop.f32.mrf.mxu0
      %v1762 = vadd.f32 %v1433, %v1761
      %1763 = vmatmul.bf16.gmra.mxu0 %v1610
      %v1764 = vpop.f32.mrf.mxu0
      %v1765 = vadd.f32 %v1436, %v1764
      %v1766 = vpop.f32.mrf.mxu0
      %v1767 = vadd.f32 %v1438, %v1766
      %1768 = vmatmul.bf16.gmra.mxu0 %v1613
      %v1769 = vpop.f32.mrf.mxu0
      %v1770 = vadd.f32 %v1441, %v1769
      %v1771 = vpop.f32.mrf.mxu0
      %v1772 = vadd.f32 %v1443, %v1771
      %1773 = vmatmul.bf16.gmra.mxu0 %v1616
      %v1774 = vpop.f32.mrf.mxu0
      %v1775 = vadd.f32 %v1446, %v1774
      %v1776 = vpop.f32.mrf.mxu0
      %v1777 = vadd.f32 %v1448, %v1776
      %1778 = vmatmul.bf16.gmra.mxu0 %v1619
      %v1779 = vpop.f32.mrf.mxu0
      %v1780 = vadd.f32 %v1451, %v1779
      %v1781 = vpop.f32.mrf.mxu0
      %v1782 = vadd.f32 %v1453, %v1781
      %1783 = vmatmul.bf16.gmra.mxu0 %v1622
      %v1784 = vpop.f32.mrf.mxu0
      %v1785 = vadd.f32 %v1456, %v1784
      %v1786 = vpop.f32.mrf.mxu0
      %v1787 = vadd.f32 %v1458, %v1786
      %1788 = vmatmul.bf16.gmra.mxu0 %v1625
      %v1789 = vpop.f32.mrf.mxu0
      %v1790 = vadd.f32 %v1461, %v1789
      %v1791 = vpop.f32.mrf.mxu0
      %v1792 = vadd.f32 %v1463, %v1791
      %1793 = vmatmul.bf16.gmra.mxu0 %v1628
      %v1794 = vpop.f32.mrf.mxu0
      %v1795 = vadd.f32 %v1466, %v1794
      %v1796 = vpop.f32.mrf.mxu0
      %v1797 = vadd.f32 %v1468, %v1796
      %1798 = vdwg.mxu0
      %v1799 = vpack.c.bf16 %v1640, %v1640
      %v1800 = vpack.c.bf16 %v1642, %v1642
      %v1801 = vpack.c.bf16 %v1645, %v1645
      %v1802 = vpack.c.bf16 %v1647, %v1647
      %v1803 = vpack.c.bf16 %v1650, %v1650
      %v1804 = vpack.c.bf16 %v1652, %v1652
      %v1805 = vpack.c.bf16 %v1655, %v1655
      %v1806 = vpack.c.bf16 %v1657, %v1657
      %v1807 = vpack.c.bf16 %v1660, %v1660
      %v1808 = vpack.c.bf16 %v1662, %v1662
      %v1809 = vpack.c.bf16 %v1665, %v1665
      %v1810 = vpack.c.bf16 %v1667, %v1667
      %v1811 = vpack.c.bf16 %v1670, %v1670
      %v1812 = vpack.c.bf16 %v1672, %v1672
      %v1813 = vpack.c.bf16 %v1675, %v1675
      %v1814 = vpack.c.bf16 %v1677, %v1677
      %v1815 = vpack.c.bf16 %v1680, %v1680
      %v1816 = vpack.c.bf16 %v1682, %v1682
      %v1817 = vpack.c.bf16 %v1685, %v1685
      %v1818 = vpack.c.bf16 %v1687, %v1687
      %v1819 = vpack.c.bf16 %v1690, %v1690
      %v1820 = vpack.c.bf16 %v1692, %v1692
      %v1821 = vpack.c.bf16 %v1695, %v1695
      %v1822 = vpack.c.bf16 %v1697, %v1697
      %v1823 = vpack.c.bf16 %v1700, %v1700
      %v1824 = vpack.c.bf16 %v1702, %v1702
      %v1825 = vpack.c.bf16 %v1705, %v1705
      %v1826 = vpack.c.bf16 %v1707, %v1707
      %v1827 = vpack.c.bf16 %v1710, %v1710
      %v1828 = vpack.c.bf16 %v1712, %v1712
      %v1829 = vpack.c.bf16 %v1715, %v1715
      %v1830 = vpack.c.bf16 %v1717, %v1717
      %v1831 = vpack.c.bf16 %v1720, %v1720
      %v1832 = vpack.c.bf16 %v1722, %v1722
      %v1833 = vpack.c.bf16 %v1725, %v1725
      %v1834 = vpack.c.bf16 %v1727, %v1727
      %v1835 = vpack.c.bf16 %v1730, %v1730
      %v1836 = vpack.c.bf16 %v1732, %v1732
      %v1837 = vpack.c.bf16 %v1735, %v1735
      %v1838 = vpack.c.bf16 %v1737, %v1737
      %v1839 = vpack.c.bf16 %v1740, %v1740
      %v1840 = vpack.c.bf16 %v1742, %v1742
      %v1841 = vpack.c.bf16 %v1745, %v1745
      %v1842 = vpack.c.bf16 %v1747, %v1747
      %v1843 = vpack.c.bf16 %v1750, %v1750
      %v1844 = vpack.c.bf16 %v1752, %v1752
      %v1845 = vpack.c.bf16 %v1755, %v1755
      %v1846 = vpack.c.bf16 %v1757, %v1757
      %v1847 = vpack.c.bf16 %v1760, %v1760
      %v1848 = vpack.c.bf16 %v1762, %v1762
      %v1849 = vpack.c.bf16 %v1765, %v1765
      %v1850 = vpack.c.bf16 %v1767, %v1767
      %v1851 = vpack.c.bf16 %v1770, %v1770
      %v1852 = vpack.c.bf16 %v1772, %v1772
      %v1853 = vpack.c.bf16 %v1775, %v1775
      %v1854 = vpack.c.bf16 %v1777, %v1777
      %v1855 = vpack.c.bf16 %v1780, %v1780
      %v1856 = vpack.c.bf16 %v1782, %v1782
      %v1857 = vpack.c.bf16 %v1785, %v1785
      %v1858 = vpack.c.bf16 %v1787, %v1787
      %v1859 = vpack.c.bf16 %v1790, %v1790
      %v1860 = vpack.c.bf16 %v1792, %v1792
      %v1861 = vpack.c.bf16 %v1795, %v1795
      %v1862 = vpack.c.bf16 %v1797, %v1797
      %vm1863 = vcmask 257024
      %1864 = vst.msk [vmem:[%s307] sm:$0xf] %vm1863, %v1799
      %1865 = vst.msk [vmem:[%s307 + $0x4] sm:$0xf] %vm1863, %v1800
      %1866 = vst.msk [vmem:[%s307 + $0x8] sm:$0xf] %vm1863, %v1801
      %1867 = vst.msk [vmem:[%s307 + $0xc] sm:$0xf] %vm1863, %v1802
      %1868 = vst.msk [vmem:[%s307 + $0x10] sm:$0xf] %vm1863, %v1803
      %1869 = vst.msk [vmem:[%s307 + $0x14] sm:$0xf] %vm1863, %v1804
      %1870 = vst.msk [vmem:[%s307 + $0x18] sm:$0xf] %vm1863, %v1805
      %1871 = vst.msk [vmem:[%s307 + $0x1c] sm:$0xf] %vm1863, %v1806
      %1872 = vst.msk [vmem:[%s307 + $0x20] sm:$0xf] %vm1863, %v1807
      %1873 = vst.msk [vmem:[%s307 + $0x24] sm:$0xf] %vm1863, %v1808
      %1874 = vst.msk [vmem:[%s307 + $0x28] sm:$0xf] %vm1863, %v1809
      %1875 = vst.msk [vmem:[%s307 + $0x2c] sm:$0xf] %vm1863, %v1810
      %1876 = vst.msk [vmem:[%s307 + $0x30] sm:$0xf] %vm1863, %v1811
      %1877 = vst.msk [vmem:[%s307 + $0x34] sm:$0xf] %vm1863, %v1812
      %1878 = vst.msk [vmem:[%s307 + $0x38] sm:$0xf] %vm1863, %v1813
      %1879 = vst.msk [vmem:[%s307 + $0x3c] sm:$0xf] %vm1863, %v1814
      %1880 = vst.msk [vmem:[%s307 + $0x40] sm:$0xf] %vm1863, %v1815
      %1881 = vst.msk [vmem:[%s307 + $0x44] sm:$0xf] %vm1863, %v1816
      %1882 = vst.msk [vmem:[%s307 + $0x48] sm:$0xf] %vm1863, %v1817
      %1883 = vst.msk [vmem:[%s307 + $0x4c] sm:$0xf] %vm1863, %v1818
      %1884 = vst.msk [vmem:[%s307 + $0x50] sm:$0xf] %vm1863, %v1819
      %1885 = vst.msk [vmem:[%s307 + $0x54] sm:$0xf] %vm1863, %v1820
      %1886 = vst.msk [vmem:[%s307 + $0x58] sm:$0xf] %vm1863, %v1821
      %1887 = vst.msk [vmem:[%s307 + $0x5c] sm:$0xf] %vm1863, %v1822
      %1888 = vst.msk [vmem:[%s307 + $0x60] sm:$0xf] %vm1863, %v1823
      %1889 = vst.msk [vmem:[%s307 + $0x64] sm:$0xf] %vm1863, %v1824
      %1890 = vst.msk [vmem:[%s307 + $0x68] sm:$0xf] %vm1863, %v1825
      %1891 = vst.msk [vmem:[%s307 + $0x6c] sm:$0xf] %vm1863, %v1826
      %1892 = vst.msk [vmem:[%s307 + $0x70] sm:$0xf] %vm1863, %v1827
      %1893 = vst.msk [vmem:[%s307 + $0x74] sm:$0xf] %vm1863, %v1828
      %1894 = vst.msk [vmem:[%s307 + $0x78] sm:$0xf] %vm1863, %v1829
      %1895 = vst.msk [vmem:[%s307 + $0x7c] sm:$0xf] %vm1863, %v1830
      %1896 = vst.msk [vmem:[%s307 + $0x80] sm:$0xf] %vm1863, %v1831
      %1897 = vst.msk [vmem:[%s307 + $0x84] sm:$0xf] %vm1863, %v1832
      %1898 = vst.msk [vmem:[%s307 + $0x88] sm:$0xf] %vm1863, %v1833
      %1899 = vst.msk [vmem:[%s307 + $0x8c] sm:$0xf] %vm1863, %v1834
      %1900 = vst.msk [vmem:[%s307 + $0x90] sm:$0xf] %vm1863, %v1835
      %1901 = vst.msk [vmem:[%s307 + $0x94] sm:$0xf] %vm1863, %v1836
      %1902 = vst.msk [vmem:[%s307 + $0x98] sm:$0xf] %vm1863, %v1837
      %1903 = vst.msk [vmem:[%s307 + $0x9c] sm:$0xf] %vm1863, %v1838
      %1904 = vst.msk [vmem:[%s307 + $0xa0] sm:$0xf] %vm1863, %v1839
      %1905 = vst.msk [vmem:[%s307 + $0xa4] sm:$0xf] %vm1863, %v1840
      %1906 = vst.msk [vmem:[%s307 + $0xa8] sm:$0xf] %vm1863, %v1841
      %1907 = vst.msk [vmem:[%s307 + $0xac] sm:$0xf] %vm1863, %v1842
      %1908 = vst.msk [vmem:[%s307 + $0xb0] sm:$0xf] %vm1863, %v1843
      %1909 = vst.msk [vmem:[%s307 + $0xb4] sm:$0xf] %vm1863, %v1844
      %1910 = vst.msk [vmem:[%s307 + $0xb8] sm:$0xf] %vm1863, %v1845
      %1911 = vst.msk [vmem:[%s307 + $0xbc] sm:$0xf] %vm1863, %v1846
      %1912 = vst.msk [vmem:[%s307 + $0xc0] sm:$0xf] %vm1863, %v1847
      %1913 = vst.msk [vmem:[%s307 + $0xc4] sm:$0xf] %vm1863, %v1848
      %1914 = vst.msk [vmem:[%s307 + $0xc8] sm:$0xf] %vm1863, %v1849
      %1915 = vst.msk [vmem:[%s307 + $0xcc] sm:$0xf] %vm1863, %v1850
      %1916 = vst.msk [vmem:[%s307 + $0xd0] sm:$0xf] %vm1863, %v1851
      %1917 = vst.msk [vmem:[%s307 + $0xd4] sm:$0xf] %vm1863, %v1852
      %1918 = vst.msk [vmem:[%s307 + $0xd8] sm:$0xf] %vm1863, %v1853
      %1919 = vst.msk [vmem:[%s307 + $0xdc] sm:$0xf] %vm1863, %v1854
      %1920 = vst.msk [vmem:[%s307 + $0xe0] sm:$0xf] %vm1863, %v1855
      %1921 = vst.msk [vmem:[%s307 + $0xe4] sm:$0xf] %vm1863, %v1856
      %1922 = vst.msk [vmem:[%s307 + $0xe8] sm:$0xf] %vm1863, %v1857
      %1923 = vst.msk [vmem:[%s307 + $0xec] sm:$0xf] %vm1863, %v1858
      %1924 = vst.msk [vmem:[%s307 + $0xf0] sm:$0xf] %vm1863, %v1859
      %1925 = vst.msk [vmem:[%s307 + $0xf4] sm:$0xf] %vm1863, %v1860
      %1926 = vst.msk [vmem:[%s307 + $0xf8] sm:$0xf] %vm1863, %v1861
      %1927 = vst.msk [vmem:[%s307 + $0xfc] sm:$0xf] %vm1863, %v1862
      %s1928 = smul.u32 64, %s19
      %p1929 = scmp.lt.s32.totalorder %s1928, 127
      %s1930 = scalar_select %p1929, %s1928, 127
      %s1931 = smul.addr %s1930, 4
      %s1932 = scalar_lea.vmem %s8, %s1931
      // Predicated region
      $region53: #{tpu_custom_call.1} parent=51 // pred_check
        %p1933 = pneg %p210
      $region54: #{tpu_custom_call.1} parent=51 // pred_check_branch
        %1935 = sbr.rel (%p1933) target = $region56
      $region55: #{tpu_custom_call.1} parent=51 // pred_region
        %s1936 = smul.u32 64, %s19
      $region56: #{tpu_custom_call.1} parent=51 // pred_fallthru
        _
    $region52: #{tpu_custom_call.1} parent=5 // pred_fallthru
      _
    %p1937 = scmp.le.s32.totalorder 2, %s14
    // Predicated region
    $region57: #{tpu_custom_call.1} parent=5 // pred_check
      %p1938 = pneg %p1937
    $region58: #{tpu_custom_call.1} parent=5 // pred_check_branch
      %1940 = sbr.rel (%p1938) target = $region60
    $region59: #{tpu_custom_call.1} parent=5 // pred_region
      %s1941 = ssub.s32 %s14, 2
      // Predicated region
      $region61: #{tpu_custom_call.1} parent=59 // pred_check
        %p1942 = pneg %p216
      $region62: #{tpu_custom_call.1} parent=59 // pred_check_branch
        %1944 = sbr.rel (%p1942) target = $region64
      $region63: #{tpu_custom_call.1} parent=59 // pred_region
        %s1945 = smul.u32 64, %s20
        %p1946 = scmp.lt.s32.totalorder %s1945, 127
        %s1947 = scalar_select %p1946, %s1945, 127
        %s1948 = smul.addr %s1947, 4
        %s1949 = scalar_lea.vmem %s8, %s1948
      $region64: #{tpu_custom_call.1} parent=59 // pred_fallthru
        _
    $region60: #{tpu_custom_call.1} parent=5 // pred_fallthru
      _
  $region6: #{tpu_custom_call.1} parent=0 // loop_footer
    %s18 = sadd.s32 1, %s14
  $region7: #{tpu_custom_call.1} parent=0 // loop_footer_branch
    %13 = sbr.rel target = $region3
  $region8: #{tpu_custom_call.1} parent=0 // loop_exit
    _

</llo_original>
